<compile_context>
chip_gen: v5e
topology: v5e:2x2
jax: 0.10.0
libtpu: 0.0.40
codegen_flags: <defaults>
</compile_context>

<pallas_src>
import jax
import jax.numpy as jnp
from jax.experimental import pallas as pl
from jax.experimental.pallas import tpu as pltpu


def _bidaf_kernel(c_ref, q_ref, cmask_ref, qmask_ref,
                  cw_ref, qw_ref, cqw_ref, bias_ref, out_ref):
    NB, H, Lc = c_ref.shape
    Lq = q_ref.shape[2]

    cw_bf = cw_ref[...].astype(jnp.bfloat16)     # (H, 1)
    qw_bf = qw_ref[...].astype(jnp.bfloat16)     # (H, 1)
    cqw = cqw_ref[...]                           # (H, 1) f32
    bias = bias_ref[0]                           # scalar f32 (SMEM)
    neg_inf = jnp.float32(-1e30)

    # Statically unrolled sub-batch loop (NB is a compile-time block dim).
    for n in range(NB):
        c_bf = c_ref[n]                          # (H, Lc) bf16
        q_bf = q_ref[n]                          # (H, Lq) bf16
        cm_row = cmask_ref[n]                    # (1, Lc) f32
        qm_col = qmask_ref[n]                    # (Lq, 1) f32

        # ---- similarity matrix, stored transposed: s_t[j, i] = s[i, j] ------
        # s2: (c_i * cq_w) . q_j — one bf16 MXU matmul contracting H (dim 0 of
        # both operands; the transpose is folded into the MXU feed, no f32 XLU).
        q_scaled = (q_bf.astype(jnp.float32) * cqw).astype(jnp.bfloat16)   # (H, Lq)
        s2_t = jnp.einsum('hq,hc->qc', q_scaled, c_bf,
                          preferred_element_type=jnp.float32)              # (Lq, Lc)
        # s0 / s1 as thin MXU matmuls (frees the VPU multiply + XLU reduce).
        s0_row = jnp.einsum('hk,hc->kc', cw_bf, c_bf,
                            preferred_element_type=jnp.float32)            # (1, Lc)
        s1_col = jnp.einsum('hq,hk->qk', q_bf, qw_bf,
                            preferred_element_type=jnp.float32)            # (Lq, 1)
        s_t = s2_t + s0_row + s1_col + bias                                # (Lq, Lc)

        # ---- masked softmax over the query axis (torch dim=2 -> axis 0) -----
        logits1 = jnp.where(qm_col != 0.0, s_t, neg_inf)
        m1 = jnp.max(logits1, axis=0, keepdims=True)
        e1 = jnp.exp(logits1 - m1)
        p1 = e1 * pl.reciprocal(jnp.sum(e1, axis=0, keepdims=True),
                                approx=True)                               # (Lq, Lc)

        # ---- masked softmax over the context axis (torch dim=1 -> axis 1) ---
        logits2 = jnp.where(cm_row != 0.0, s_t, neg_inf)
        m2 = jnp.max(logits2, axis=1, keepdims=True)
        e2 = jnp.exp(logits2 - m2)
        p2 = e2 * pl.reciprocal(jnp.sum(e2, axis=1, keepdims=True),
                                approx=True)                               # (Lq, Lc)

        p1_bf = p1.astype(jnp.bfloat16)
        p2_bf = p2.astype(jnp.bfloat16)

        # q2c attention, re-associated (no (Lc, Lc) intermediate):
        #   t[:, j] = sum_i p2[j, i] c[:, i]   (contract Lc in packed bf16)
        t = jnp.einsum('hc,qc->hq', c_bf, p2_bf,
                       preferred_element_type=jnp.float32)                 # (H, Lq)

        # Fuse the two K=Lq matmuls that share p1 into one (2H,Lq)@(Lq,Lc):
        #   a[:, i] = sum_j p1[j, i] q[:, j] ;  b[:, i] = sum_j p1[j, i] t[:, j]
        ab_lhs = jnp.concatenate([q_bf, t.astype(jnp.bfloat16)], axis=0)   # (2H, Lq)
        ab = jnp.dot(ab_lhs, p1_bf, preferred_element_type=jnp.float32)    # (2H, Lc)
        a = ab[:H, :]
        b = ab[H:, :]

        # ---- bf16 output, four lane-dense slice stores: [c; a; c*a; c*b] ----
        c_f32 = c_bf.astype(jnp.float32)
        out_ref[n, 0 * H:1 * H, :] = c_bf
        out_ref[n, 1 * H:2 * H, :] = a.astype(jnp.bfloat16)
        out_ref[n, 2 * H:3 * H, :] = (c_f32 * a).astype(jnp.bfloat16)
        out_ref[n, 3 * H:4 * H, :] = (c_f32 * b).astype(jnp.bfloat16)


def _pick_nb(batch, max_nb=4):
    """Largest divisor of `batch` <= max_nb, preferring a grid of >= 2 steps
    (keeps both v7x TensorCores busy for small batches)."""
    divisors = [d for d in range(1, max_nb + 1) if batch % d == 0]
    preferred = [d for d in divisors if batch // d >= 2]
    return max(preferred) if preferred else max(divisors)


def bidaf_attention(c, q, c_mask, q_mask, c_weight, q_weight, cq_weight, bias,
                    *, nb=None):
    """c: (B, H, Lc), q: (B, H, Lq), masks: (B, Lc)/(B, Lq).

    Returns (B, 4H, Lc) in bfloat16 (the kernel is writeback-bound; cast
    downstream only if f32 is strictly required)."""
    B, H, Lc = c.shape
    Lq = q.shape[2]
    if nb is None:
        nb = _pick_nb(B)
    assert B % nb == 0, (B, nb)

    # Activations travel to the kernel as bf16 (halves HBM DMA bytes; matmuls
    # accumulate in f32 inside the kernel).
    c_bf = c.astype(jnp.bfloat16)
    q_bf = q.astype(jnp.bfloat16)
    # Masks pre-shaped (free metadata reshape) so the kernel needs no relayout.
    cm = c_mask.astype(jnp.float32).reshape(B, 1, Lc)
    qm = q_mask.astype(jnp.float32).reshape(B, Lq, 1)
    # All three weights as (H, 1) columns (uniform layout for the kernel).
    cw = c_weight.reshape(H, 1).astype(jnp.float32)
    qw = q_weight.reshape(H, 1).astype(jnp.float32)
    cqw = cq_weight.reshape(H, 1).astype(jnp.float32)
    bias_s = bias.reshape(1).astype(jnp.float32)

    return pl.pallas_call(
        _bidaf_kernel,
        out_shape=jax.ShapeDtypeStruct((B, 4 * H, Lc), jnp.bfloat16),
        grid_spec=pltpu.PrefetchScalarGridSpec(
            num_scalar_prefetch=0,
            grid=(B // nb,),
            in_specs=[
                pl.BlockSpec((nb, H, Lc), lambda i: (i, 0, 0)),    # c   (bf16)
                pl.BlockSpec((nb, H, Lq), lambda i: (i, 0, 0)),    # q   (bf16)
                pl.BlockSpec((nb, 1, Lc), lambda i: (i, 0, 0)),    # c_mask rows
                pl.BlockSpec((nb, Lq, 1), lambda i: (i, 0, 0)),    # q_mask cols
                pl.BlockSpec((H, 1), lambda i: (0, 0)),            # c_weight
                pl.BlockSpec((H, 1), lambda i: (0, 0)),            # q_weight
                pl.BlockSpec((H, 1), lambda i: (0, 0)),            # cq_weight
                pl.BlockSpec(memory_space=pltpu.MemorySpace.SMEM),  # bias scalar
            ],
            out_specs=pl.BlockSpec((nb, 4 * H, Lc), lambda i: (i, 0, 0)),
        ),
        compiler_params=pltpu.CompilerParams(
            dimension_semantics=("parallel",),
            # 48 MiB: enough for NB<=4 double-buffered blocks at realistic BiDAF
            # sizes, and within v7x's 64 MiB physical VMEM (v5e/v6e have 128 MiB).
            vmem_limit_bytes=48 * 1024 * 1024,
        ),
    )(c_bf, q_bf, cm, qm, cw, qw, cqw, bias_s)


def _reference(c_nhl, q_nhl, c_mask, q_mask, cw, qw, cqw, bias):
    """Pure-JAX f32 reference mirroring the PyTorch forward (eval mode)."""
    c = jnp.transpose(c_nhl, (0, 2, 1)).astype(jnp.float32)   # (B, Lc, H)
    q = jnp.transpose(q_nhl, (0, 2, 1)).astype(jnp.float32)   # (B, Lq, H)
    B, Lc, H = c.shape
    Lq = q.shape[1]
    s0 = c @ cw.reshape(H, 1)                                  # (B, Lc, 1)
    s1 = jnp.transpose(q @ qw.reshape(H, 1), (0, 2, 1))        # (B, 1, Lq)
    s2 = (c * cqw.reshape(1, 1, H)) @ jnp.transpose(q, (0, 2, 1))
    s = s0 + s1 + s2 + bias.reshape(())
    qm = q_mask.reshape(B, 1, Lq).astype(jnp.float32)
    cm = c_mask.reshape(B, Lc, 1).astype(jnp.float32)
    s1m = jax.nn.softmax(qm * s + (1 - qm) * (-1e30), axis=2)
    s2m = jax.nn.softmax(cm * s + (1 - cm) * (-1e30), axis=1)
    a = s1m @ q
    b = (s1m @ jnp.transpose(s2m, (0, 2, 1))) @ c
    x = jnp.concatenate([c, a, c * a, c * b], axis=2)
    return jnp.transpose(x, (0, 2, 1))                         # (B, 4H, Lc)


if __name__ == "__main__":
    key = jax.random.PRNGKey(0)
    # Small shapes (B=4 so the NB=2 sub-batch path and a 2-step grid are both
    # exercised).  Real BiDAF sizes: H~200, Lc~384-512, Lq~48-64, B>=32.
    B, H, Lc, Lq = 4, 32, 16, 8

    k1, k2, k3, k4, k5 = jax.random.split(key, 5)
    c = jax.random.normal(k1, (B, H, Lc), dtype=jnp.float32)
    q = jax.random.normal(k2, (B, H, Lq), dtype=jnp.float32)

    # Masks: 1 for valid positions, 0 for padding.
    c_lens = jnp.array([[Lc], [Lc - 3], [Lc - 1], [Lc - 5]])
    q_lens = jnp.array([[Lq], [Lq - 2], [Lq - 1], [Lq - 3]])
    c_mask = (jnp.arange(Lc)[None, :] < c_lens).astype(jnp.float32)
    q_mask = (jnp.arange(Lq)[None, :] < q_lens).astype(jnp.float32)

    # Deterministic xavier-uniform-style parameter init (matches __init__ shapes).
    def xavier(k, shape, fan_in, fan_out):
        bound = (6.0 / (fan_in + fan_out)) ** 0.5
        return jax.random.uniform(k, shape, jnp.float32, -bound, bound)

    c_weight = xavier(k3, (H, 1), 1, H)      # nn.Parameter(torch.empty(H, 1))
    q_weight = xavier(k4, (H, 1), 1, H)      # nn.Parameter(torch.empty(H, 1))
    cq_weight = xavier(k5, (1, 1, H), H, 1)  # nn.Parameter(torch.empty(1, 1, H))
    bias = jnp.zeros((1,), jnp.float32)      # nn.init.constant_(bias, 0)

    out = bidaf_attention(c, q, c_mask, q_mask, c_weight, q_weight, cq_weight, bias)
    out = jax.block_until_ready(out)
    assert out.shape == (B, 4 * H, Lc), out.shape
    assert out.dtype == jnp.bfloat16, out.dtype

    # The kernel consumes bf16 activations and emits bf16; compare against an
    # f32 reference on the same bf16-quantized inputs so the diff isolates the
    # kernel-side approximations (bf16 MXU operands/weights, bf16 output
    # rounding, approx reciprocal, q2c re-association).
    ref = _reference(c.astype(jnp.bfloat16), q.astype(jnp.bfloat16),
                     c_mask, q_mask, c_weight, q_weight, cq_weight, bias)

    # The context passthrough slice must be bit-exact in bf16 (layout sanity).
    assert jnp.array_equal(out[:, :H, :], c.astype(jnp.bfloat16))

    out_f32 = out.astype(jnp.float32)
    max_err = float(jnp.max(jnp.abs(out_f32 - ref)))
    scale = float(jnp.max(jnp.abs(ref)))
    assert max_err <= 3e-2 * scale + 5e-3, (max_err, scale)

    print("KERNEL_OK")
</pallas_src>

<mosaic_0001>
module attributes {stable_mosaic.version = 11 : i64} {
  func.func @_bidaf_kernel(%arg0: i32, %arg1: memref<2x32x16xbf16, #tpu.memory_space<vmem>>, %arg2: memref<2x32x8xbf16, #tpu.memory_space<vmem>>, %arg3: memref<2x1x16xf32, #tpu.memory_space<vmem>>, %arg4: memref<2x8x1xf32, #tpu.memory_space<vmem>>, %arg5: memref<32x1xf32, #tpu.memory_space<vmem>>, %arg6: memref<32x1xf32, #tpu.memory_space<vmem>>, %arg7: memref<32x1xf32, #tpu.memory_space<vmem>>, %arg8: memref<1xf32, #tpu.memory_space<smem>>, %arg9: memref<2x128x16xbf16, #tpu.memory_space<vmem>>) attributes {dimension_semantics = [#tpu.dimension_semantics<parallel>], iteration_bounds = array<i64: 2>, scalar_prefetch = 0 : i64, scratch_operands = 0 : i64, tpu.core_type = #tpu.core_type<tc>, window_params = [{transform_indices = @transform_0, window_bounds = array<i64: 2, 32, 16>}, {transform_indices = @transform_1, window_bounds = array<i64: 2, 32, 8>}, {transform_indices = @transform_2, window_bounds = array<i64: 2, 1, 16>}, {transform_indices = @transform_3, window_bounds = array<i64: 2, 8, 1>}, {pipeline_mode = #tpu.pipeline_mode<synchronous>, transform_indices = @transform_4, window_bounds = array<i64: 32, 1>}, {pipeline_mode = #tpu.pipeline_mode<synchronous>, transform_indices = @transform_5, window_bounds = array<i64: 32, 1>}, {pipeline_mode = #tpu.pipeline_mode<synchronous>, transform_indices = @transform_6, window_bounds = array<i64: 32, 1>}, {transform_indices = @transform_7, window_bounds = array<i64: 1>}, {transform_indices = @transform_8, window_bounds = array<i64: 2, 128, 16>}]} {
    %c0 = arith.constant 0 : index
    %c0_0 = arith.constant 0 : index
    %0 = vector.load %arg5[%c0, %c0_0] : memref<32x1xf32, #tpu.memory_space<vmem>>, vector<32x1xf32>
    %1 = arith.truncf %0 : vector<32x1xf32> to vector<32x1xbf16>
    %c0_1 = arith.constant 0 : index
    %c0_2 = arith.constant 0 : index
    %2 = vector.load %arg6[%c0_1, %c0_2] : memref<32x1xf32, #tpu.memory_space<vmem>>, vector<32x1xf32>
    %3 = arith.truncf %2 : vector<32x1xf32> to vector<32x1xbf16>
    %c0_3 = arith.constant 0 : index
    %c0_4 = arith.constant 0 : index
    %4 = vector.load %arg7[%c0_3, %c0_4] : memref<32x1xf32, #tpu.memory_space<vmem>>, vector<32x1xf32>
    %c0_5 = arith.constant 0 : index
    %5 = memref.load %arg8[%c0_5] : memref<1xf32, #tpu.memory_space<smem>>
    %c0_6 = arith.constant 0 : index
    %c0_7 = arith.constant 0 : index
    %c0_8 = arith.constant 0 : index
    %6 = vector.load %arg1[%c0_6, %c0_7, %c0_8] : memref<2x32x16xbf16, #tpu.memory_space<vmem>>, vector<1x32x16xbf16>
    %7 = vector.shape_cast %6 : vector<1x32x16xbf16> to vector<32x16xbf16>
    %c0_9 = arith.constant 0 : index
    %c0_10 = arith.constant 0 : index
    %c0_11 = arith.constant 0 : index
    %8 = vector.load %arg2[%c0_9, %c0_10, %c0_11] : memref<2x32x8xbf16, #tpu.memory_space<vmem>>, vector<1x32x8xbf16>
    %9 = vector.shape_cast %8 : vector<1x32x8xbf16> to vector<32x8xbf16>
    %c0_12 = arith.constant 0 : index
    %c0_13 = arith.constant 0 : index
    %c0_14 = arith.constant 0 : index
    %10 = vector.load %arg3[%c0_12, %c0_13, %c0_14] : memref<2x1x16xf32, #tpu.memory_space<vmem>>, vector<1x1x16xf32>
    %11 = vector.shape_cast %10 : vector<1x1x16xf32> to vector<1x16xf32>
    %c0_15 = arith.constant 0 : index
    %c0_16 = arith.constant 0 : index
    %c0_17 = arith.constant 0 : index
    %12 = vector.load %arg4[%c0_15, %c0_16, %c0_17] : memref<2x8x1xf32, #tpu.memory_space<vmem>>, vector<1x8x1xf32>
    %13 = vector.shape_cast %12 : vector<1x8x1xf32> to vector<8x1xf32>
    %14 = arith.extf %9 : vector<32x8xbf16> to vector<32x8xf32>
    %15 = vector.broadcast %4 : vector<32x1xf32> to vector<32x8xf32>
    %16 = arith.mulf %14, %15 : vector<32x8xf32>
    %17 = arith.truncf %16 : vector<32x8xf32> to vector<32x8xbf16>
    "tpu.trace_start"() <{level = 10 : i32, message = "hq,hc->qc"}> : () -> ()
    %cst = arith.constant dense<0.000000e+00> : vector<8x16xf32>
    %18 = tpu.matmul %17, %7, %cst {dimension_numbers = #tpu.dot_dimension_numbers<[0], [0], [1], [1], [0, 1, 1, 1], [], []>} : vector<32x8xbf16>, vector<32x16xbf16>, vector<8x16xf32> -> vector<8x16xf32>
    "tpu.trace_stop"() : () -> ()
    "tpu.trace_start"() <{level = 10 : i32, message = "hk,hc->kc"}> : () -> ()
    %cst_18 = arith.constant dense<0.000000e+00> : vector<1x16xf32>
    %19 = tpu.matmul %1, %7, %cst_18 {dimension_numbers = #tpu.dot_dimension_numbers<[0], [0], [1], [1], [0, 1, 1, 1], [], []>} : vector<32x1xbf16>, vector<32x16xbf16>, vector<1x16xf32> -> vector<1x16xf32>
    "tpu.trace_stop"() : () -> ()
    "tpu.trace_start"() <{level = 10 : i32, message = "hq,hk->qk"}> : () -> ()
    %cst_19 = arith.constant dense<0.000000e+00> : vector<8x1xf32>
    %20 = tpu.matmul %9, %3, %cst_19 {dimension_numbers = #tpu.dot_dimension_numbers<[0], [0], [1], [1], [0, 1, 1, 1], [], []>} : vector<32x8xbf16>, vector<32x1xbf16>, vector<8x1xf32> -> vector<8x1xf32>
    "tpu.trace_stop"() : () -> ()
    %21 = vector.broadcast %19 : vector<1x16xf32> to vector<8x16xf32>
    %22 = arith.addf %18, %21 : vector<8x16xf32>
    %23 = vector.broadcast %20 : vector<8x1xf32> to vector<8x16xf32>
    %24 = arith.addf %22, %23 : vector<8x16xf32>
    %25 = vector.broadcast %5 : f32 to vector<8x16xf32>
    %26 = arith.addf %24, %25 : vector<8x16xf32>
    %cst_20 = arith.constant 0.000000e+00 : f32
    %27 = vector.broadcast %cst_20 : f32 to vector<8x1xf32>
    %28 = arith.cmpf one, %13, %27 : vector<8x1xf32>
    %cst_21 = arith.constant -1.000000e+30 : f32
    %29 = vector.shape_cast %28 : vector<8x1xi1> to vector<8x1xi1>
    %30 = vector.broadcast %29 : vector<8x1xi1> to vector<8x16xi1>
    %31 = vector.broadcast %cst_21 : f32 to vector<8x16xf32>
    %32 = arith.select %30, %26, %31 : vector<8x16xi1>, vector<8x16xf32>
    %cst_22 = arith.constant dense<0xFF800000> : vector<16xf32>
    %33 = vector.multi_reduction <maximumf>, %32, %cst_22 [0] : vector<8x16xf32> to vector<16xf32>
    %34 = vector.shape_cast %33 : vector<16xf32> to vector<1x16xf32>
    %35 = vector.broadcast %34 : vector<1x16xf32> to vector<8x16xf32>
    %36 = arith.subf %32, %35 : vector<8x16xf32>
    %37 = math.exp %36 : vector<8x16xf32>
    %cst_23 = arith.constant dense<0.000000e+00> : vector<16xf32>
    %38 = vector.multi_reduction <add>, %37, %cst_23 [0] : vector<8x16xf32> to vector<16xf32>
    %39 = vector.shape_cast %38 : vector<16xf32> to vector<1x16xf32>
    %40 = tpu.reciprocal %39 {approx = true} : vector<1x16xf32> -> vector<1x16xf32>
    %41 = vector.broadcast %40 : vector<1x16xf32> to vector<8x16xf32>
    %42 = arith.mulf %37, %41 : vector<8x16xf32>
    %cst_24 = arith.constant 0.000000e+00 : f32
    %43 = vector.broadcast %cst_24 : f32 to vector<1x16xf32>
    %44 = arith.cmpf one, %11, %43 : vector<1x16xf32>
    %cst_25 = arith.constant -1.000000e+30 : f32
    %45 = vector.shape_cast %44 : vector<1x16xi1> to vector<1x16xi1>
    %46 = vector.broadcast %45 : vector<1x16xi1> to vector<8x16xi1>
    %47 = vector.broadcast %cst_25 : f32 to vector<8x16xf32>
    %48 = arith.select %46, %26, %47 : vector<8x16xi1>, vector<8x16xf32>
    %cst_26 = arith.constant dense<0xFF800000> : vector<8xf32>
    %49 = vector.multi_reduction <maximumf>, %48, %cst_26 [1] : vector<8x16xf32> to vector<8xf32>
    %50 = vector.shape_cast %49 : vector<8xf32> to vector<8x1xf32>
    %51 = vector.broadcast %50 : vector<8x1xf32> to vector<8x16xf32>
    %52 = arith.subf %48, %51 : vector<8x16xf32>
    %53 = math.exp %52 : vector<8x16xf32>
    %cst_27 = arith.constant dense<0.000000e+00> : vector<8xf32>
    %54 = vector.multi_reduction <add>, %53, %cst_27 [1] : vector<8x16xf32> to vector<8xf32>
    %55 = vector.shape_cast %54 : vector<8xf32> to vector<8x1xf32>
    %56 = tpu.reciprocal %55 {approx = true} : vector<8x1xf32> -> vector<8x1xf32>
    %57 = vector.broadcast %56 : vector<8x1xf32> to vector<8x16xf32>
    %58 = arith.mulf %53, %57 : vector<8x16xf32>
    %59 = arith.truncf %42 : vector<8x16xf32> to vector<8x16xbf16>
    %60 = arith.truncf %58 : vector<8x16xf32> to vector<8x16xbf16>
    "tpu.trace_start"() <{level = 10 : i32, message = "hc,qc->hq"}> : () -> ()
    %cst_28 = arith.constant dense<0.000000e+00> : vector<32x8xf32>
    %61 = tpu.matmul %7, %60, %cst_28 {dimension_numbers = #tpu.dot_dimension_numbers<[1], [1], [0], [0], [0, 0, 1, 0], [], []>} : vector<32x16xbf16>, vector<8x16xbf16>, vector<32x8xf32> -> vector<32x8xf32>
    "tpu.trace_stop"() : () -> ()
    %62 = arith.truncf %61 : vector<32x8xf32> to vector<32x8xbf16>
    %63 = tpu.concatenate %9, %62 in 0 : vector<32x8xbf16>, vector<32x8xbf16> -> vector<64x8xbf16>
    %cst_29 = arith.constant dense<0.000000e+00> : vector<64x16xf32>
    %64 = tpu.matmul %63, %59, %cst_29 {dimension_numbers = #tpu.dot_dimension_numbers<[1], [0], [0], [1], [0, 0, 1, 1], [], []>} : vector<64x8xbf16>, vector<8x16xbf16>, vector<64x16xf32> -> vector<64x16xf32>
    %65 = vector.extract_strided_slice %64 {offsets = [0, 0], sizes = [32, 16], strides = [1, 1]} : vector<64x16xf32> to vector<32x16xf32>
    %66 = vector.extract_strided_slice %64 {offsets = [32, 0], sizes = [32, 16], strides = [1, 1]} : vector<64x16xf32> to vector<32x16xf32>
    %67 = arith.extf %7 : vector<32x16xbf16> to vector<32x16xf32>
    %c0_30 = arith.constant 0 : index
    %c0_31 = arith.constant 0 : index
    %c0_32 = arith.constant 0 : index
    %68 = vector.load %arg9[%c0_30, %c0_31, %c0_32] : memref<2x128x16xbf16, #tpu.memory_space<vmem>>, vector<1x32x16xbf16>
    %69 = vector.shape_cast %68 : vector<1x32x16xbf16> to vector<32x16xbf16>
    %70 = vector.shape_cast %7 : vector<32x16xbf16> to vector<1x32x16xbf16>
    tpu.vector_store %arg9[%c0_30, %c0_31, %c0_32], %70 {strides = array<i32>} : memref<2x128x16xbf16, #tpu.memory_space<vmem>>, vector<1x32x16xbf16>,
    %71 = arith.truncf %65 : vector<32x16xf32> to vector<32x16xbf16>
    %c0_33 = arith.constant 0 : index
    %c32 = arith.constant 32 : index
    %c0_34 = arith.constant 0 : index
    %72 = vector.load %arg9[%c0_33, %c32, %c0_34] : memref<2x128x16xbf16, #tpu.memory_space<vmem>>, vector<1x32x16xbf16>
    %73 = vector.shape_cast %72 : vector<1x32x16xbf16> to vector<32x16xbf16>
    %74 = vector.shape_cast %71 : vector<32x16xbf16> to vector<1x32x16xbf16>
    tpu.vector_store %arg9[%c0_33, %c32, %c0_34], %74 {strides = array<i32>} : memref<2x128x16xbf16, #tpu.memory_space<vmem>>, vector<1x32x16xbf16>,
    %75 = arith.mulf %67, %65 : vector<32x16xf32>
    %76 = arith.truncf %75 : vector<32x16xf32> to vector<32x16xbf16>
    %c0_35 = arith.constant 0 : index
    %c64 = arith.constant 64 : index
    %c0_36 = arith.constant 0 : index
    %77 = vector.load %arg9[%c0_35, %c64, %c0_36] : memref<2x128x16xbf16, #tpu.memory_space<vmem>>, vector<1x32x16xbf16>
    %78 = vector.shape_cast %77 : vector<1x32x16xbf16> to vector<32x16xbf16>
    %79 = vector.shape_cast %76 : vector<32x16xbf16> to vector<1x32x16xbf16>
    tpu.vector_store %arg9[%c0_35, %c64, %c0_36], %79 {strides = array<i32>} : memref<2x128x16xbf16, #tpu.memory_space<vmem>>, vector<1x32x16xbf16>,
    %80 = arith.mulf %67, %66 : vector<32x16xf32>
    %81 = arith.truncf %80 : vector<32x16xf32> to vector<32x16xbf16>
    %c0_37 = arith.constant 0 : index
    %c96 = arith.constant 96 : index
    %c0_38 = arith.constant 0 : index
    %82 = vector.load %arg9[%c0_37, %c96, %c0_38] : memref<2x128x16xbf16, #tpu.memory_space<vmem>>, vector<1x32x16xbf16>
    %83 = vector.shape_cast %82 : vector<1x32x16xbf16> to vector<32x16xbf16>
    %84 = vector.shape_cast %81 : vector<32x16xbf16> to vector<1x32x16xbf16>
    tpu.vector_store %arg9[%c0_37, %c96, %c0_38], %84 {strides = array<i32>} : memref<2x128x16xbf16, #tpu.memory_space<vmem>>, vector<1x32x16xbf16>,
    %c1 = arith.constant 1 : index
    %c0_39 = arith.constant 0 : index
    %c0_40 = arith.constant 0 : index
    %85 = vector.load %arg1[%c1, %c0_39, %c0_40] : memref<2x32x16xbf16, #tpu.memory_space<vmem>>, vector<1x32x16xbf16>
    %86 = vector.shape_cast %85 : vector<1x32x16xbf16> to vector<32x16xbf16>
    %c1_41 = arith.constant 1 : index
    %c0_42 = arith.constant 0 : index
    %c0_43 = arith.constant 0 : index
    %87 = vector.load %arg2[%c1_41, %c0_42, %c0_43] : memref<2x32x8xbf16, #tpu.memory_space<vmem>>, vector<1x32x8xbf16>
    %88 = vector.shape_cast %87 : vector<1x32x8xbf16> to vector<32x8xbf16>
    %c1_44 = arith.constant 1 : index
    %c0_45 = arith.constant 0 : index
    %c0_46 = arith.constant 0 : index
    %89 = vector.load %arg3[%c1_44, %c0_45, %c0_46] : memref<2x1x16xf32, #tpu.memory_space<vmem>>, vector<1x1x16xf32>
    %90 = vector.shape_cast %89 : vector<1x1x16xf32> to vector<1x16xf32>
    %c1_47 = arith.constant 1 : index
    %c0_48 = arith.constant 0 : index
    %c0_49 = arith.constant 0 : index
    %91 = vector.load %arg4[%c1_47, %c0_48, %c0_49] : memref<2x8x1xf32, #tpu.memory_space<vmem>>, vector<1x8x1xf32>
    %92 = vector.shape_cast %91 : vector<1x8x1xf32> to vector<8x1xf32>
    %93 = arith.extf %88 : vector<32x8xbf16> to vector<32x8xf32>
    %94 = vector.broadcast %4 : vector<32x1xf32> to vector<32x8xf32>
    %95 = arith.mulf %93, %94 : vector<32x8xf32>
    %96 = arith.truncf %95 : vector<32x8xf32> to vector<32x8xbf16>
    "tpu.trace_start"() <{level = 10 : i32, message = "hq,hc->qc"}> : () -> ()
    %cst_50 = arith.constant dense<0.000000e+00> : vector<8x16xf32>
    %97 = tpu.matmul %96, %86, %cst_50 {dimension_numbers = #tpu.dot_dimension_numbers<[0], [0], [1], [1], [0, 1, 1, 1], [], []>} : vector<32x8xbf16>, vector<32x16xbf16>, vector<8x16xf32> -> vector<8x16xf32>
    "tpu.trace_stop"() : () -> ()
    "tpu.trace_start"() <{level = 10 : i32, message = "hk,hc->kc"}> : () -> ()
    %cst_51 = arith.constant dense<0.000000e+00> : vector<1x16xf32>
    %98 = tpu.matmul %1, %86, %cst_51 {dimension_numbers = #tpu.dot_dimension_numbers<[0], [0], [1], [1], [0, 1, 1, 1], [], []>} : vector<32x1xbf16>, vector<32x16xbf16>, vector<1x16xf32> -> vector<1x16xf32>
    "tpu.trace_stop"() : () -> ()
    "tpu.trace_start"() <{level = 10 : i32, message = "hq,hk->qk"}> : () -> ()
    %cst_52 = arith.constant dense<0.000000e+00> : vector<8x1xf32>
    %99 = tpu.matmul %88, %3, %cst_52 {dimension_numbers = #tpu.dot_dimension_numbers<[0], [0], [1], [1], [0, 1, 1, 1], [], []>} : vector<32x8xbf16>, vector<32x1xbf16>, vector<8x1xf32> -> vector<8x1xf32>
    "tpu.trace_stop"() : () -> ()
    %100 = vector.broadcast %98 : vector<1x16xf32> to vector<8x16xf32>
    %101 = arith.addf %97, %100 : vector<8x16xf32>
    %102 = vector.broadcast %99 : vector<8x1xf32> to vector<8x16xf32>
    %103 = arith.addf %101, %102 : vector<8x16xf32>
    %104 = vector.broadcast %5 : f32 to vector<8x16xf32>
    %105 = arith.addf %103, %104 : vector<8x16xf32>
    %cst_53 = arith.constant 0.000000e+00 : f32
    %106 = vector.broadcast %cst_53 : f32 to vector<8x1xf32>
    %107 = arith.cmpf one, %92, %106 : vector<8x1xf32>
    %cst_54 = arith.constant -1.000000e+30 : f32
    %108 = vector.shape_cast %107 : vector<8x1xi1> to vector<8x1xi1>
    %109 = vector.broadcast %108 : vector<8x1xi1> to vector<8x16xi1>
    %110 = vector.broadcast %cst_54 : f32 to vector<8x16xf32>
    %111 = arith.select %109, %105, %110 : vector<8x16xi1>, vector<8x16xf32>
    %cst_55 = arith.constant dense<0xFF800000> : vector<16xf32>
    %112 = vector.multi_reduction <maximumf>, %111, %cst_55 [0] : vector<8x16xf32> to vector<16xf32>
    %113 = vector.shape_cast %112 : vector<16xf32> to vector<1x16xf32>
    %114 = vector.broadcast %113 : vector<1x16xf32> to vector<8x16xf32>
    %115 = arith.subf %111, %114 : vector<8x16xf32>
    %116 = math.exp %115 : vector<8x16xf32>
    %cst_56 = arith.constant dense<0.000000e+00> : vector<16xf32>
    %117 = vector.multi_reduction <add>, %116, %cst_56 [0] : vector<8x16xf32> to vector<16xf32>
    %118 = vector.shape_cast %117 : vector<16xf32> to vector<1x16xf32>
    %119 = tpu.reciprocal %118 {approx = true} : vector<1x16xf32> -> vector<1x16xf32>
    %120 = vector.broadcast %119 : vector<1x16xf32> to vector<8x16xf32>
    %121 = arith.mulf %116, %120 : vector<8x16xf32>
    %cst_57 = arith.constant 0.000000e+00 : f32
    %122 = vector.broadcast %cst_57 : f32 to vector<1x16xf32>
    %123 = arith.cmpf one, %90, %122 : vector<1x16xf32>
    %cst_58 = arith.constant -1.000000e+30 : f32
    %124 = vector.shape_cast %123 : vector<1x16xi1> to vector<1x16xi1>
    %125 = vector.broadcast %124 : vector<1x16xi1> to vector<8x16xi1>
    %126 = vector.broadcast %cst_58 : f32 to vector<8x16xf32>
    %127 = arith.select %125, %105, %126 : vector<8x16xi1>, vector<8x16xf32>
    %cst_59 = arith.constant dense<0xFF800000> : vector<8xf32>
    %128 = vector.multi_reduction <maximumf>, %127, %cst_59 [1] : vector<8x16xf32> to vector<8xf32>
    %129 = vector.shape_cast %128 : vector<8xf32> to vector<8x1xf32>
    %130 = vector.broadcast %129 : vector<8x1xf32> to vector<8x16xf32>
    %131 = arith.subf %127, %130 : vector<8x16xf32>
    %132 = math.exp %131 : vector<8x16xf32>
    %cst_60 = arith.constant dense<0.000000e+00> : vector<8xf32>
    %133 = vector.multi_reduction <add>, %132, %cst_60 [1] : vector<8x16xf32> to vector<8xf32>
    %134 = vector.shape_cast %133 : vector<8xf32> to vector<8x1xf32>
    %135 = tpu.reciprocal %134 {approx = true} : vector<8x1xf32> -> vector<8x1xf32>
    %136 = vector.broadcast %135 : vector<8x1xf32> to vector<8x16xf32>
    %137 = arith.mulf %132, %136 : vector<8x16xf32>
    %138 = arith.truncf %121 : vector<8x16xf32> to vector<8x16xbf16>
    %139 = arith.truncf %137 : vector<8x16xf32> to vector<8x16xbf16>
    "tpu.trace_start"() <{level = 10 : i32, message = "hc,qc->hq"}> : () -> ()
    %cst_61 = arith.constant dense<0.000000e+00> : vector<32x8xf32>
    %140 = tpu.matmul %86, %139, %cst_61 {dimension_numbers = #tpu.dot_dimension_numbers<[1], [1], [0], [0], [0, 0, 1, 0], [], []>} : vector<32x16xbf16>, vector<8x16xbf16>, vector<32x8xf32> -> vector<32x8xf32>
    "tpu.trace_stop"() : () -> ()
    %141 = arith.truncf %140 : vector<32x8xf32> to vector<32x8xbf16>
    %142 = tpu.concatenate %88, %141 in 0 : vector<32x8xbf16>, vector<32x8xbf16> -> vector<64x8xbf16>
    %cst_62 = arith.constant dense<0.000000e+00> : vector<64x16xf32>
    %143 = tpu.matmul %142, %138, %cst_62 {dimension_numbers = #tpu.dot_dimension_numbers<[1], [0], [0], [1], [0, 0, 1, 1], [], []>} : vector<64x8xbf16>, vector<8x16xbf16>, vector<64x16xf32> -> vector<64x16xf32>
    %144 = vector.extract_strided_slice %143 {offsets = [0, 0], sizes = [32, 16], strides = [1, 1]} : vector<64x16xf32> to vector<32x16xf32>
    %145 = vector.extract_strided_slice %143 {offsets = [32, 0], sizes = [32, 16], strides = [1, 1]} : vector<64x16xf32> to vector<32x16xf32>
    %146 = arith.extf %86 : vector<32x16xbf16> to vector<32x16xf32>
    %c1_63 = arith.constant 1 : index
    %c0_64 = arith.constant 0 : index
    %c0_65 = arith.constant 0 : index
    %147 = vector.load %arg9[%c1_63, %c0_64, %c0_65] : memref<2x128x16xbf16, #tpu.memory_space<vmem>>, vector<1x32x16xbf16>
    %148 = vector.shape_cast %147 : vector<1x32x16xbf16> to vector<32x16xbf16>
    %149 = vector.shape_cast %86 : vector<32x16xbf16> to vector<1x32x16xbf16>
    tpu.vector_store %arg9[%c1_63, %c0_64, %c0_65], %149 {strides = array<i32>} : memref<2x128x16xbf16, #tpu.memory_space<vmem>>, vector<1x32x16xbf16>,
    %150 = arith.truncf %144 : vector<32x16xf32> to vector<32x16xbf16>
    %c1_66 = arith.constant 1 : index
    %c32_67 = arith.constant 32 : index
    %c0_68 = arith.constant 0 : index
    %151 = vector.load %arg9[%c1_66, %c32_67, %c0_68] : memref<2x128x16xbf16, #tpu.memory_space<vmem>>, vector<1x32x16xbf16>
    %152 = vector.shape_cast %151 : vector<1x32x16xbf16> to vector<32x16xbf16>
    %153 = vector.shape_cast %150 : vector<32x16xbf16> to vector<1x32x16xbf16>
    tpu.vector_store %arg9[%c1_66, %c32_67, %c0_68], %153 {strides = array<i32>} : memref<2x128x16xbf16, #tpu.memory_space<vmem>>, vector<1x32x16xbf16>,
    %154 = arith.mulf %146, %144 : vector<32x16xf32>
    %155 = arith.truncf %154 : vector<32x16xf32> to vector<32x16xbf16>
    %c1_69 = arith.constant 1 : index
    %c64_70 = arith.constant 64 : index
    %c0_71 = arith.constant 0 : index
    %156 = vector.load %arg9[%c1_69, %c64_70, %c0_71] : memref<2x128x16xbf16, #tpu.memory_space<vmem>>, vector<1x32x16xbf16>
    %157 = vector.shape_cast %156 : vector<1x32x16xbf16> to vector<32x16xbf16>
    %158 = vector.shape_cast %155 : vector<32x16xbf16> to vector<1x32x16xbf16>
    tpu.vector_store %arg9[%c1_69, %c64_70, %c0_71], %158 {strides = array<i32>} : memref<2x128x16xbf16, #tpu.memory_space<vmem>>, vector<1x32x16xbf16>,
    %159 = arith.mulf %146, %145 : vector<32x16xf32>
    %160 = arith.truncf %159 : vector<32x16xf32> to vector<32x16xbf16>
    %c1_72 = arith.constant 1 : index
    %c96_73 = arith.constant 96 : index
    %c0_74 = arith.constant 0 : index
    %161 = vector.load %arg9[%c1_72, %c96_73, %c0_74] : memref<2x128x16xbf16, #tpu.memory_space<vmem>>, vector<1x32x16xbf16>
    %162 = vector.shape_cast %161 : vector<1x32x16xbf16> to vector<32x16xbf16>
    %163 = vector.shape_cast %160 : vector<32x16xbf16> to vector<1x32x16xbf16>
    tpu.vector_store %arg9[%c1_72, %c96_73, %c0_74], %163 {strides = array<i32>} : memref<2x128x16xbf16, #tpu.memory_space<vmem>>, vector<1x32x16xbf16>,
    return
  }
  func.func @transform_0(%arg0: i32) -> (i32, i32, i32) {
    %c0_i32 = arith.constant 0 : i32
    %c0_i32_0 = arith.constant 0 : i32
    %c0_i32_1 = arith.constant 0 : i32
    return %arg0, %c0_i32, %c0_i32_0 : i32, i32, i32
  }
  func.func @transform_1(%arg0: i32) -> (i32, i32, i32) {
    %c0_i32 = arith.constant 0 : i32
    %c0_i32_0 = arith.constant 0 : i32
    %c0_i32_1 = arith.constant 0 : i32
    return %arg0, %c0_i32, %c0_i32_0 : i32, i32, i32
  }
  func.func @transform_2(%arg0: i32) -> (i32, i32, i32) {
    %c0_i32 = arith.constant 0 : i32
    %c0_i32_0 = arith.constant 0 : i32
    %c0_i32_1 = arith.constant 0 : i32
    return %arg0, %c0_i32, %c0_i32_0 : i32, i32, i32
  }
  func.func @transform_3(%arg0: i32) -> (i32, i32, i32) {
    %c0_i32 = arith.constant 0 : i32
    %c0_i32_0 = arith.constant 0 : i32
    %c0_i32_1 = arith.constant 0 : i32
    return %arg0, %c0_i32, %c0_i32_0 : i32, i32, i32
  }
  func.func @transform_4(%arg0: i32) -> (i32, i32) {
    %c0_i32 = arith.constant 0 : i32
    %c0_i32_0 = arith.constant 0 : i32
    %c0_i32_1 = arith.constant 0 : i32
    return %c0_i32, %c0_i32_0 : i32, i32
  }
  func.func @transform_5(%arg0: i32) -> (i32, i32) {
    %c0_i32 = arith.constant 0 : i32
    %c0_i32_0 = arith.constant 0 : i32
    %c0_i32_1 = arith.constant 0 : i32
    return %c0_i32, %c0_i32_0 : i32, i32
  }
  func.func @transform_6(%arg0: i32) -> (i32, i32) {
    %c0_i32 = arith.constant 0 : i32
    %c0_i32_0 = arith.constant 0 : i32
    %c0_i32_1 = arith.constant 0 : i32
    return %c0_i32, %c0_i32_0 : i32, i32
  }
  func.func @transform_7(%arg0: i32) -> i32 {
    %c0_i32 = arith.constant 0 : i32
    %c0_i32_0 = arith.constant 0 : i32
    return %c0_i32 : i32
  }
  func.func @transform_8(%arg0: i32) -> (i32, i32, i32) {
    %c0_i32 = arith.constant 0 : i32
    %c0_i32_0 = arith.constant 0 : i32
    %c0_i32_1 = arith.constant 0 : i32
    return %arg0, %c0_i32, %c0_i32_0 : i32, i32, i32
  }
}

</mosaic_0001>

<llo_original>
// kernel: tpu_custom_call.1
$region0: #{tpu_custom_call.1}
  #allocation0 [shape = 'u32[]', space=smem, size = 0x4, offset = 0x4, fixed_abs, tag = 'smem constant byte address 0x4 - core index']
  #allocation1 [shape = 'u32[72,128]{1,0:T(1,128)}', space=vmem, size = 0x9000, scoped, tag = 'internal scratch']
  #allocation2 [shape = 'f32[1]{0:T(128)S(6)}', space=smem, size = 0x200, scoped, tag = 'scoped memory for tpu_custom_call.1']
  %s0 = inlined_call_operand.vmem [shape: bf16[4,32,16], index: 0, kind: input, shape index: {}]
  %s1 = inlined_call_operand.vmem [shape: bf16[4,32,8], index: 1, kind: input, shape index: {}]
  %s2 = inlined_call_operand.vmem [shape: f32[4,1,16], index: 2, kind: input, shape index: {}]
  %s3 = inlined_call_operand.vmem [shape: f32[4,8,1], index: 3, kind: input, shape index: {}]
  %s4 = inlined_call_operand.vmem [shape: f32[32,1], index: 4, kind: input, shape index: {}]
  %s5 = inlined_call_operand.vmem [shape: f32[32,1], index: 5, kind: input, shape index: {}]
  %s6 = inlined_call_operand.vmem [shape: f32[32,1], index: 6, kind: input, shape index: {}]
  %s7 = inlined_call_operand.<no memory space> [shape: f32[1], index: 7, kind: input, shape index: {}]
  %s8 = inlined_call_operand.vmem [shape: bf16[4,128,16], index: 8, kind: output, shape index: {}]
  %s9 = sld [smem:[#allocation0]]
  $region65: #{tpu_custom_call.1} parent=0
    _
  %s11 = ssub.s32 1, %s9
  %s12 = scalar_select 0, %s11, %s9
  %13 = sst [smem:[#allocation2]] %s7
  loop: start=0, step=1, limit=4
  $region2: #{tpu_custom_call.1} parent=0 // loop_pre_header
    _
  $region3: #{tpu_custom_call.1} parent=0 // loop_header
    %s15 = sphi 0, %s19
    %p16 = scmp.ge.s32.totalorder %s15, 4
    %s25 = sphi 0, %s27
    %s28 = sphi 0, %s25
    %s29 = sphi 0, %s28
    %s45 = sphi 0, %s29
    %s51 = sphi 0, %s53
    %s54 = sphi 0, %s51
    %s55 = sphi 0, %s54
    %s71 = sphi 0, %s55
    %s77 = sphi 0, %s79
    %s80 = sphi 0, %s77
    %s81 = sphi 0, %s80
    %s97 = sphi 0, %s81
    %s103 = sphi 0, %s105
    %s106 = sphi 0, %s103
    %s107 = sphi 0, %s106
    %s123 = sphi 0, %s107
    %s127 = sphi 0, %s127
    %s129 = sphi 0, %s127
    %s130 = sphi 0, %s129
    %s144 = sphi 0, %s130
    %s148 = sphi 0, %s148
    %s150 = sphi 0, %s148
    %s151 = sphi 0, %s150
    %s165 = sphi 0, %s151
    %s169 = sphi 0, %s169
    %s171 = sphi 0, %s169
    %s172 = sphi 0, %s171
    %s186 = sphi 0, %s172
    %s190 = sphi 0, %s190
    %s192 = sphi 0, %s190
    %s193 = sphi 0, %s192
    %s207 = sphi 0, %s193
    %s213 = sphi 0, %s215
    %s216 = sphi 0, %s213
    %s217 = sphi 0, %s216
    %s233 = sphi 0, %s217
  $region4: #{tpu_custom_call.1} parent=0 // loop_header_branch
    %18 = sbr.rel (%p16) target = $region8
  $region5: #{tpu_custom_call.1} parent=0 // loop_body
    %s20 = ssub.s32 %s15, 1
    %s21 = ssub.s32 %s15, 2
    %s22 = sadd.s32 %s15, 1
    %s23 = ssub.s32 %s15, %s22
    %p24 = scmp.eq.s32.totalorder %s23, 0
    %s26 = sadd.s32 %s25, 1
    %s27 = scalar_select %p24, %s25, %s26
    %p30 = pneg %p24
    %p31 = scmp.eq.s32.totalorder %s15, 1
    %p32 = por %p30, %p31
    %p33 = scmp.ne.s32.totalorder %s25, %s28
    %p34 = scmp.eq.s32.totalorder %s15, 0
    %p35 = por %p33, %p34
    %p36 = scmp.ne.s32.totalorder %s25, %s28
    %p37 = scmp.eq.s32.totalorder %s20, 1
    %p38 = por %p36, %p37
    %p39 = scmp.ne.s32.totalorder %s28, %s29
    %p40 = scmp.eq.s32.totalorder %s20, 0
    %p41 = por %p39, %p40
    %p42 = scmp.ne.s32.totalorder %s28, %s29
    %p43 = scmp.eq.s32.totalorder %s21, 1
    %p44 = por %p42, %p43
    %p46 = scmp.ne.s32.totalorder %s29, %s45
    %p47 = scmp.eq.s32.totalorder %s21, 0
    %p48 = por %p46, %p47
    %s49 = ssub.s32 %s15, %s22
    %p50 = scmp.eq.s32.totalorder %s49, 0
    %s52 = sadd.s32 %s51, 1
    %s53 = scalar_select %p50, %s51, %s52
    %p56 = pneg %p50
    %p57 = scmp.eq.s32.totalorder %s15, 1
    %p58 = por %p56, %p57
    %p59 = scmp.ne.s32.totalorder %s51, %s54
    %p60 = scmp.eq.s32.totalorder %s15, 0
    %p61 = por %p59, %p60
    %p62 = scmp.ne.s32.totalorder %s51, %s54
    %p63 = scmp.eq.s32.totalorder %s20, 1
    %p64 = por %p62, %p63
    %p65 = scmp.ne.s32.totalorder %s54, %s55
    %p66 = scmp.eq.s32.totalorder %s20, 0
    %p67 = por %p65, %p66
    %p68 = scmp.ne.s32.totalorder %s54, %s55
    %p69 = scmp.eq.s32.totalorder %s21, 1
    %p70 = por %p68, %p69
    %p72 = scmp.ne.s32.totalorder %s55, %s71
    %p73 = scmp.eq.s32.totalorder %s21, 0
    %p74 = por %p72, %p73
    %s75 = ssub.s32 %s15, %s22
    %p76 = scmp.eq.s32.totalorder %s75, 0
    %s78 = sadd.s32 %s77, 1
    %s79 = scalar_select %p76, %s77, %s78
    %p82 = pneg %p76
    %p83 = scmp.eq.s32.totalorder %s15, 1
    %p84 = por %p82, %p83
    %p85 = scmp.ne.s32.totalorder %s77, %s80
    %p86 = scmp.eq.s32.totalorder %s15, 0
    %p87 = por %p85, %p86
    %p88 = scmp.ne.s32.totalorder %s77, %s80
    %p89 = scmp.eq.s32.totalorder %s20, 1
    %p90 = por %p88, %p89
    %p91 = scmp.ne.s32.totalorder %s80, %s81
    %p92 = scmp.eq.s32.totalorder %s20, 0
    %p93 = por %p91, %p92
    %p94 = scmp.ne.s32.totalorder %s80, %s81
    %p95 = scmp.eq.s32.totalorder %s21, 1
    %p96 = por %p94, %p95
    %p98 = scmp.ne.s32.totalorder %s81, %s97
    %p99 = scmp.eq.s32.totalorder %s21, 0
    %p100 = por %p98, %p99
    %s101 = ssub.s32 %s15, %s22
    %p102 = scmp.eq.s32.totalorder %s101, 0
    %s104 = sadd.s32 %s103, 1
    %s105 = scalar_select %p102, %s103, %s104
    %p108 = pneg %p102
    %p109 = scmp.eq.s32.totalorder %s15, 1
    %p110 = por %p108, %p109
    %p111 = scmp.ne.s32.totalorder %s103, %s106
    %p112 = scmp.eq.s32.totalorder %s15, 0
    %p113 = por %p111, %p112
    %p114 = scmp.ne.s32.totalorder %s103, %s106
    %p115 = scmp.eq.s32.totalorder %s20, 1
    %p116 = por %p114, %p115
    %p117 = scmp.ne.s32.totalorder %s106, %s107
    %p118 = scmp.eq.s32.totalorder %s20, 0
    %p119 = por %p117, %p118
    %p120 = scmp.ne.s32.totalorder %s106, %s107
    %p121 = scmp.eq.s32.totalorder %s21, 1
    %p122 = por %p120, %p121
    %p124 = scmp.ne.s32.totalorder %s107, %s123
    %p125 = scmp.eq.s32.totalorder %s21, 0
    %p126 = por %p124, %p125
    %s128 = sadd.s32 %s127, 1
    %p131 = scmp.eq.s32.totalorder %s15, 1
    %p132 = scmp.ne.s32.totalorder %s127, %s129
    %p133 = scmp.eq.s32.totalorder %s15, 0
    %p134 = por %p132, %p133
    %p135 = scmp.ne.s32.totalorder %s127, %s129
    %p136 = scmp.eq.s32.totalorder %s20, 1
    %p137 = por %p135, %p136
    %p138 = scmp.ne.s32.totalorder %s129, %s130
    %p139 = scmp.eq.s32.totalorder %s20, 0
    %p140 = por %p138, %p139
    %p141 = scmp.ne.s32.totalorder %s129, %s130
    %p142 = scmp.eq.s32.totalorder %s21, 1
    %p143 = por %p141, %p142
    %p145 = scmp.ne.s32.totalorder %s130, %s144
    %p146 = scmp.eq.s32.totalorder %s21, 0
    %p147 = por %p145, %p146
    %s149 = sadd.s32 %s148, 1
    %p152 = scmp.eq.s32.totalorder %s15, 1
    %p153 = scmp.ne.s32.totalorder %s148, %s150
    %p154 = scmp.eq.s32.totalorder %s15, 0
    %p155 = por %p153, %p154
    %p156 = scmp.ne.s32.totalorder %s148, %s150
    %p157 = scmp.eq.s32.totalorder %s20, 1
    %p158 = por %p156, %p157
    %p159 = scmp.ne.s32.totalorder %s150, %s151
    %p160 = scmp.eq.s32.totalorder %s20, 0
    %p161 = por %p159, %p160
    %p162 = scmp.ne.s32.totalorder %s150, %s151
    %p163 = scmp.eq.s32.totalorder %s21, 1
    %p164 = por %p162, %p163
    %p166 = scmp.ne.s32.totalorder %s151, %s165
    %p167 = scmp.eq.s32.totalorder %s21, 0
    %p168 = por %p166, %p167
    %s170 = sadd.s32 %s169, 1
    %p173 = scmp.eq.s32.totalorder %s15, 1
    %p174 = scmp.ne.s32.totalorder %s169, %s171
    %p175 = scmp.eq.s32.totalorder %s15, 0
    %p176 = por %p174, %p175
    %p177 = scmp.ne.s32.totalorder %s169, %s171
    %p178 = scmp.eq.s32.totalorder %s20, 1
    %p179 = por %p177, %p178
    %p180 = scmp.ne.s32.totalorder %s171, %s172
    %p181 = scmp.eq.s32.totalorder %s20, 0
    %p182 = por %p180, %p181
    %p183 = scmp.ne.s32.totalorder %s171, %s172
    %p184 = scmp.eq.s32.totalorder %s21, 1
    %p185 = por %p183, %p184
    %p187 = scmp.ne.s32.totalorder %s172, %s186
    %p188 = scmp.eq.s32.totalorder %s21, 0
    %p189 = por %p187, %p188
    %s191 = sadd.s32 %s190, 1
    %p194 = scmp.eq.s32.totalorder %s15, 1
    %p195 = scmp.ne.s32.totalorder %s190, %s192
    %p196 = scmp.eq.s32.totalorder %s15, 0
    %p197 = por %p195, %p196
    %p198 = scmp.ne.s32.totalorder %s190, %s192
    %p199 = scmp.eq.s32.totalorder %s20, 1
    %p200 = por %p198, %p199
    %p201 = scmp.ne.s32.totalorder %s192, %s193
    %p202 = scmp.eq.s32.totalorder %s20, 0
    %p203 = por %p201, %p202
    %p204 = scmp.ne.s32.totalorder %s192, %s193
    %p205 = scmp.eq.s32.totalorder %s21, 1
    %p206 = por %p204, %p205
    %p208 = scmp.ne.s32.totalorder %s193, %s207
    %p209 = scmp.eq.s32.totalorder %s21, 0
    %p210 = por %p208, %p209
    %s211 = ssub.s32 %s15, %s22
    %p212 = scmp.eq.s32.totalorder %s211, 0
    %s214 = sadd.s32 %s213, 1
    %s215 = scalar_select %p212, %s213, %s214
    %p218 = pneg %p212
    %p219 = scmp.eq.s32.totalorder %s15, 1
    %p220 = por %p218, %p219
    %p221 = scmp.ne.s32.totalorder %s213, %s216
    %p222 = scmp.eq.s32.totalorder %s15, 0
    %p223 = por %p221, %p222
    %p224 = scmp.ne.s32.totalorder %s213, %s216
    %p225 = scmp.eq.s32.totalorder %s20, 1
    %p226 = por %p224, %p225
    %p227 = scmp.ne.s32.totalorder %s216, %s217
    %p228 = scmp.eq.s32.totalorder %s20, 0
    %p229 = por %p227, %p228
    %p230 = scmp.ne.s32.totalorder %s216, %s217
    %p231 = scmp.eq.s32.totalorder %s21, 1
    %p232 = por %p230, %p231
    %p234 = scmp.ne.s32.totalorder %s217, %s233
    %p235 = scmp.eq.s32.totalorder %s21, 0
    %p236 = por %p234, %p235
    %p237 = scmp.le.s32.totalorder 1, %s15
    %p238 = scmp.lt.s32.totalorder %s15, 3
    %p239 = pnand %p237, %p238
    %p240 = pneg %p239
    // Predicated region
    $region9: #{tpu_custom_call.1} parent=5 // pred_check
      _
    $region10: #{tpu_custom_call.1} parent=5 // pred_check_branch
      %242 = sbr.rel (%p239) target = $region12
    $region11: #{tpu_custom_call.1} parent=5 // pred_region
      %s243 = ssub.s32 %s15, 1
      // Predicated region
      $region13: #{tpu_custom_call.1} parent=11 // pred_check
        %p244 = pneg %p140
      $region14: #{tpu_custom_call.1} parent=11 // pred_check_branch
        %246 = sbr.rel (%p244) target = $region16
      $region15: #{tpu_custom_call.1} parent=11 // pred_region
        _
      $region16: #{tpu_custom_call.1} parent=11 // pred_fallthru
        _
      // Predicated region
      $region17: #{tpu_custom_call.1} parent=11 // pred_check
        %p247 = pneg %p161
      $region18: #{tpu_custom_call.1} parent=11 // pred_check_branch
        %249 = sbr.rel (%p247) target = $region20
      $region19: #{tpu_custom_call.1} parent=11 // pred_region
        _
      $region20: #{tpu_custom_call.1} parent=11 // pred_fallthru
        _
      // Predicated region
      $region21: #{tpu_custom_call.1} parent=11 // pred_check
        %p250 = pneg %p182
      $region22: #{tpu_custom_call.1} parent=11 // pred_check_branch
        %252 = sbr.rel (%p250) target = $region24
      $region23: #{tpu_custom_call.1} parent=11 // pred_region
        _
      $region24: #{tpu_custom_call.1} parent=11 // pred_fallthru
        _
      // Predicated region
      $region25: #{tpu_custom_call.1} parent=11 // pred_check
        %p253 = pneg %p203
      $region26: #{tpu_custom_call.1} parent=11 // pred_check_branch
        %255 = sbr.rel (%p253) target = $region28
      $region27: #{tpu_custom_call.1} parent=11 // pred_region
        _
      $region28: #{tpu_custom_call.1} parent=11 // pred_fallthru
        _
    $region12: #{tpu_custom_call.1} parent=5 // pred_fallthru
      _
    %p256 = scmp.lt.s32.totalorder %s15, 2
    // Predicated region
    $region29: #{tpu_custom_call.1} parent=5 // pred_check
      %p257 = pneg %p256
    $region30: #{tpu_custom_call.1} parent=5 // pred_check_branch
      %259 = sbr.rel (%p257) target = $region32
    $region31: #{tpu_custom_call.1} parent=5 // pred_region
      // Predicated region
      $region33: #{tpu_custom_call.1} parent=31 // pred_check
        %p260 = pneg %p35
      $region34: #{tpu_custom_call.1} parent=31 // pred_check_branch
        %262 = sbr.rel (%p260) target = $region36
      $region35: #{tpu_custom_call.1} parent=31 // pred_region
        %s263 = smul.u32 2, %s15
        %p264 = scmp.lt.s32.totalorder %s263, 3
        %s265 = scalar_select %p264, %s263, 3
        %s266 = smul.addr %s265, 4
        %s267 = smul.addr %s266, 4
        %s268 = scalar_lea.vmem %s0, %s267
        %s269 = smul.u32 2, %s15
      $region36: #{tpu_custom_call.1} parent=31 // pred_fallthru
        _
      // Predicated region
      $region37: #{tpu_custom_call.1} parent=31 // pred_check
        %p270 = pneg %p61
      $region38: #{tpu_custom_call.1} parent=31 // pred_check_branch
        %272 = sbr.rel (%p270) target = $region40
      $region39: #{tpu_custom_call.1} parent=31 // pred_region
        %s273 = smul.u32 2, %s15
        %p274 = scmp.lt.s32.totalorder %s273, 3
        %s275 = scalar_select %p274, %s273, 3
        %s276 = smul.addr %s275, 4
        %s277 = smul.addr %s276, 4
        %s278 = scalar_lea.vmem %s1, %s277
        %s279 = smul.u32 2, %s15
      $region40: #{tpu_custom_call.1} parent=31 // pred_fallthru
        _
      // Predicated region
      $region41: #{tpu_custom_call.1} parent=31 // pred_check
        %p280 = pneg %p87
      $region42: #{tpu_custom_call.1} parent=31 // pred_check_branch
        %282 = sbr.rel (%p280) target = $region44
      $region43: #{tpu_custom_call.1} parent=31 // pred_region
        %s283 = smul.u32 2, %s15
        %p284 = scmp.lt.s32.totalorder %s283, 3
        %s285 = scalar_select %p284, %s283, 3
        %s286 = scalar_lea.vmem %s2, %s285
        %s287 = smul.u32 2, %s15
      $region44: #{tpu_custom_call.1} parent=31 // pred_fallthru
        _
      // Predicated region
      $region45: #{tpu_custom_call.1} parent=31 // pred_check
        %p288 = pneg %p113
      $region46: #{tpu_custom_call.1} parent=31 // pred_check_branch
        %290 = sbr.rel (%p288) target = $region48
      $region47: #{tpu_custom_call.1} parent=31 // pred_region
        %s291 = smul.u32 2, %s15
        %p292 = scmp.lt.s32.totalorder %s291, 3
        %s293 = scalar_select %p292, %s291, 3
        %s294 = smul.addr %s293, 8
        %s295 = scalar_lea.vmem %s3, %s294
        %s296 = smul.u32 2, %s15
      $region48: #{tpu_custom_call.1} parent=31 // pred_fallthru
        _
    $region32: #{tpu_custom_call.1} parent=5 // pred_fallthru
      _
    %p297 = scmp.le.s32.totalorder 1, %s15
    %p298 = scmp.lt.s32.totalorder %s15, 3
    %p299 = pnand %p297, %p298
    %p300 = pneg %p299
    // Predicated region
    $region49: #{tpu_custom_call.1} parent=5 // pred_check
      _
    $region50: #{tpu_custom_call.1} parent=5 // pred_check_branch
      %302 = sbr.rel (%p299) target = $region52
    $region51: #{tpu_custom_call.1} parent=5 // pred_region
      %s303 = ssub.s32 %s15, 1
      %s304 = smul.u32 2, %s20
      %p305 = scmp.lt.s32.totalorder %s304, 3
      %s306 = scalar_select %p305, %s304, 3
      %s307 = smul.addr %s306, 4
      %s308 = smul.addr %s307, 4
      %s309 = scalar_lea.vmem %s0, %s308
      %p310 = pneg %p41
      %p311 = pneg %p38
      %s312 = smul.u32 2, %s20
      %p313 = scmp.lt.s32.totalorder %s312, 3
      %s314 = scalar_select %p313, %s312, 3
      %s315 = smul.addr %s314, 4
      %s316 = smul.addr %s315, 4
      %s317 = scalar_lea.vmem %s1, %s316
      %p318 = pneg %p67
      %p319 = pneg %p64
      %s320 = smul.u32 2, %s20
      %p321 = scmp.lt.s32.totalorder %s320, 3
      %s322 = scalar_select %p321, %s320, 3
      %s323 = scalar_lea.vmem %s2, %s322
      %p324 = pneg %p93
      %p325 = pneg %p90
      %s326 = smul.u32 2, %s20
      %p327 = scmp.lt.s32.totalorder %s326, 3
      %s328 = scalar_select %p327, %s326, 3
      %s329 = smul.addr %s328, 8
      %s330 = scalar_lea.vmem %s3, %s329
      %p331 = pneg %p119
      %p332 = pneg %p116
      %p333 = pneg %p140
      %p334 = pneg %p137
      %p335 = pneg %p161
      %p336 = pneg %p158
      %p337 = pneg %p182
      %p338 = pneg %p179
      %p339 = pneg %p203
      %p340 = pneg %p200
      %p341 = pneg %p229
      %p342 = pneg %p226
      %s343 = smul.u32 2, %s20
      %p344 = scmp.lt.s32.totalorder %s343, 3
      %s345 = scalar_select %p344, %s343, 3
      %s346 = smul.addr %s345, 16
      %s347 = smul.addr %s346, 4
      %s348 = scalar_lea.vmem %s8, %s347
      %s349 = smul.u32 2, %s20
      %p350 = scmp.lt.s32.totalorder %s349, 3
      %s351 = scalar_select %p350, %s349, 3
      %s352 = smul.addr %s351, 4
      %s353 = smul.addr %s352, 4
      %s354 = scalar_lea.vmem %s0, %s353
      %s355 = smul.u32 2, %s20
      %s356 = smul.u32 2, %s20
      %p357 = scmp.lt.s32.totalorder %s356, 3
      %s358 = scalar_select %p357, %s356, 3
      %s359 = smul.addr %s358, 4
      %s360 = smul.addr %s359, 4
      %s361 = scalar_lea.vmem %s1, %s360
      %s362 = smul.u32 2, %s20
      %s363 = smul.u32 2, %s20
      %p364 = scmp.lt.s32.totalorder %s363, 3
      %s365 = scalar_select %p364, %s363, 3
      %s366 = scalar_lea.vmem %s2, %s365
      %s367 = smul.u32 2, %s20
      %s368 = smul.u32 2, %s20
      %p369 = scmp.lt.s32.totalorder %s368, 3
      %s370 = scalar_select %p369, %s368, 3
      %s371 = smul.addr %s370, 8
      %s372 = scalar_lea.vmem %s3, %s371
      %s373 = smul.u32 2, %s20
      %s374 = smul.u32 2, %s20
      %p375 = scmp.lt.s32.totalorder %s374, 3
      %s376 = scalar_select %p375, %s374, 3
      %s377 = smul.addr %s376, 16
      %s378 = smul.addr %s377, 4
      %s379 = scalar_lea.vmem %s8, %s378
      %s380 = smul.u32 2, %s20
      %v382 = vld [vmem:[%s4] sm:$0xff]
      %v383 = vld [vmem:[%s4 + $0x8] sm:$0xff]
      %v384 = vld [vmem:[%s4 + $0x10] sm:$0xff]
      %v385 = vld [vmem:[%s4 + $0x18] sm:$0xff]
      %v386 = vpack.c.bf16 %v383, %v382
      %v387 = vpack.c.bf16 %v385, %v384
      %v388 = vld [vmem:[%s5] sm:$0xff]
      %v389 = vld [vmem:[%s5 + $0x8] sm:$0xff]
      %v390 = vld [vmem:[%s5 + $0x10] sm:$0xff]
      %v391 = vld [vmem:[%s5 + $0x18] sm:$0xff]
      %v392 = vpack.c.bf16 %v389, %v388
      %v393 = vpack.c.bf16 %v391, %v390
      %v394 = vld [vmem:[%s6] sm:$0xff]
      %v395 = vld [vmem:[%s6 + $0x8] sm:$0xff]
      %v396 = vld [vmem:[%s6 + $0x10] sm:$0xff]
      %v397 = vld [vmem:[%s6 + $0x18] sm:$0xff]
      %s398 = sld [smem:[#allocation2]]
      %v399 = vld [vmem:[%s354] sm:$0xf]
      %v400 = vld [vmem:[%s354 + $0x4] sm:$0xf]
      %v401 = vld [vmem:[%s354 + $0x8] sm:$0xf]
      %v402 = vld [vmem:[%s354 + $0xc] sm:$0xf]
      %v403 = vld [vmem:[%s361] sm:$0xf]
      %v404 = vld [vmem:[%s361 + $0x4] sm:$0xf]
      %v405 = vld [vmem:[%s361 + $0x8] sm:$0xf]
      %v406 = vld [vmem:[%s361 + $0xc] sm:$0xf]
      %v407 = vld [vmem:[%s366] sm:$0x1]
      %v408 = vld [vmem:[%s372] sm:$0xff]
      %v409 = vunpack.c.l.bf16 %v403
      %v410 = vunpack.c.l.bf16 %v404
      %v411 = vunpack.c.l.bf16 %v405
      %v412 = vunpack.c.l.bf16 %v406
      %414 = vset.pattern.permute.xlu0 0
      %415 = vperm.xlu0 %414, %v394
      %v416 = vpop.permute.xlu0 %415
      %419 = vset.pattern.permute.xlu0 0
      %420 = vperm.xlu0 %419, %v395
      %v421 = vpop.permute.xlu0 %420
      %424 = vset.pattern.permute.xlu0 0
      %425 = vperm.xlu0 %424, %v396
      %v426 = vpop.permute.xlu0 %425
      %429 = vset.pattern.permute.xlu0 0
      %430 = vperm.xlu0 %429, %v397
      %v431 = vpop.permute.xlu0 %430
      %v433 = vmul.f32 %v409, %v416
      %v434 = vmul.f32 %v410, %v421
      %v435 = vmul.f32 %v411, %v426
      %v436 = vmul.f32 %v412, %v431
      %v437 = vpack.c.bf16 %v434, %v433
      %v438 = vpack.c.bf16 %v436, %v435
      %439 = vxpose.xlu0.c.b16.start [1/8] %v386, 128
      %440 = vxpose.xlu0.c.b16.cont [2/8] %v387, 128
      %441 = vxpose.xlu0.c.b16.cont [3/8] 0, 128
      %442 = vxpose.xlu0.c.b16.cont [4/8] 0, 128
      %443 = vxpose.xlu0.c.b16.cont [5/8] 0, 128
      %444 = vxpose.xlu0.c.b16.cont [6/8] 0, 128
      %445 = vxpose.xlu0.c.b16.cont [7/8] 0, 128
      %446 = vxpose.xlu0.c.b16.end [8/8] 0, 128
      %v447 = vpop.trf.xlu0
      %v448 = vpop.trf.xlu0
      %v449 = vpop.trf.xlu0
      %v450 = vpop.trf.xlu0
      %v451 = vpop.trf.xlu0
      %v452 = vpop.trf.xlu0
      %v453 = vpop.trf.xlu0
      %v454 = vpop.trf.xlu0
      %v459 = vunpack.c.l.b16 %v399
      %v460 = vunpack.c.l.b16 %v400
      %v461 = vunpack.c.l.b16 %v401
      %v462 = vunpack.c.l.b16 %v402
      %v463 = vpack.c.b16 %v460, %v459
      %v464 = vpack.c.b16 %v462, %v461
      %vm467 = vcmask 261120
      %v469 = vsel %vm467, %v447, 0
      %471 = vmatpush.bf16.msra.mxu0 0
      %472 = vmatpush.bf16.msra.mxu0 0
      %473 = vmatpush.bf16.msra.mxu0 0
      %474 = vmatpush.bf16.msra.mxu0 0
      %475 = vmatpush.bf16.msra.mxu0 0
      %476 = vmatpush.bf16.msra.mxu0 0
      %477 = vmatpush.bf16.msra.mxu0 %v464
      %478 = vmatpush.bf16.msra.mxu0 %v463
      %479 = vmatmul.bf16.gmra.mxu0 %v469
      %v480 = vpop.f32.mrf.mxu0
      %v481 = vadd.f32 0.0, %v480
      %v482 = vpop.f32.mrf.mxu0
      %483 = vdwg.mxu0
      %v488 = vunpack.c.l.b16 %v403
      %v489 = vunpack.c.l.b16 %v404
      %v490 = vunpack.c.l.b16 %v405
      %v491 = vunpack.c.l.b16 %v406
      %v492 = vpack.c.b16 %v489, %v488
      %v493 = vpack.c.b16 %v491, %v490
      %496 = vxpose.xlu0.c.b16.start [1/8] %v492, 128
      %497 = vxpose.xlu0.c.b16.cont [2/8] %v493, 128
      %498 = vxpose.xlu0.c.b16.cont [3/8] 0, 128
      %499 = vxpose.xlu0.c.b16.cont [4/8] 0, 128
      %500 = vxpose.xlu0.c.b16.cont [5/8] 0, 128
      %501 = vxpose.xlu0.c.b16.cont [6/8] 0, 128
      %502 = vxpose.xlu0.c.b16.cont [7/8] 0, 128
      %503 = vxpose.xlu0.c.b16.end [8/8] 0, 128
      %v504 = vpop.trf.xlu0
      %v505 = vpop.trf.xlu0
      %v506 = vpop.trf.xlu0
      %v507 = vpop.trf.xlu0
      %v508 = vpop.trf.xlu0
      %v509 = vpop.trf.xlu0
      %v510 = vpop.trf.xlu0
      %v511 = vpop.trf.xlu0
      %v513 = vsel %vm467, %v504, 0
      %515 = vmatpush.bf16.msra.mxu0 0
      %516 = vmatpush.bf16.msra.mxu0 0
      %517 = vmatpush.bf16.msra.mxu0 0
      %518 = vmatpush.bf16.msra.mxu0 0
      %519 = vmatpush.bf16.msra.mxu0 0
      %520 = vmatpush.bf16.msra.mxu0 0
      %521 = vmatpush.bf16.msra.mxu0 %v393
      %522 = vmatpush.bf16.msra.mxu0 %v392
      %523 = vmatmul.bf16.gmra.mxu0 %v513
      %v524 = vpop.f32.mrf.mxu0
      %v525 = vadd.f32 0.0, %v524
      %v526 = vpop.f32.mrf.mxu0
      %527 = vdwg.mxu0
      %v528 = vperm.slane %v481, 0
      %529 = vxpose.xlu0.c.b16.start [1/8] %v437, 128
      %530 = vxpose.xlu0.c.b16.cont [2/8] %v438, 128
      %531 = vxpose.xlu0.c.b16.cont [3/8] 0, 128
      %532 = vxpose.xlu0.c.b16.cont [4/8] 0, 128
      %533 = vxpose.xlu0.c.b16.cont [5/8] 0, 128
      %534 = vxpose.xlu0.c.b16.cont [6/8] 0, 128
      %535 = vxpose.xlu0.c.b16.cont [7/8] 0, 128
      %536 = vxpose.xlu0.c.b16.end [8/8] 0, 128
      %v537 = vpop.trf.xlu0
      %v538 = vpop.trf.xlu0
      %v539 = vpop.trf.xlu0
      %v540 = vpop.trf.xlu0
      %v541 = vpop.trf.xlu0
      %v542 = vpop.trf.xlu0
      %v543 = vpop.trf.xlu0
      %v544 = vpop.trf.xlu0
      %v546 = vsel %vm467, %v537, 0
      %548 = vmatpush.bf16.msra.mxu0 0
      %549 = vmatpush.bf16.msra.mxu0 0
      %550 = vmatpush.bf16.msra.mxu0 0
      %551 = vmatpush.bf16.msra.mxu0 0
      %552 = vmatpush.bf16.msra.mxu0 0
      %553 = vmatpush.bf16.msra.mxu0 0
      %554 = vmatpush.bf16.msra.mxu0 %v464
      %555 = vmatpush.bf16.msra.mxu0 %v463
      %556 = vmatmul.bf16.gmra.mxu0 %v546
      %v557 = vpop.f32.mrf.mxu0
      %v558 = vadd.f32 %v528, %v557
      %v559 = vpop.f32.mrf.mxu0
      %560 = vdwg.mxu0
      %562 = vset.pattern.permute.xlu0 0
      %563 = vperm.xlu0 %562, %v525
      %v564 = vpop.permute.xlu0 %563
      %v566 = vadd.f32 %v558, %v564
      %v567 = vstv %s398
      %v568 = vadd.f32 %v566, %v567
      %vm569 = vcmp.ne.f32.partialorder %v408, 0.0
      %v570 = vsel %vm569, 1, 0
      %571 = vset.pattern.permute.xlu0 0
      %572 = vperm.xlu0 %571, %v570
      %v573 = vpop.permute.xlu0 %572
      %vm574 = vcmp.eq.s32.totalorder %v573, 1
      %v575 = vsel %vm574, %v568, -1e+30
      %vm576 = vcmask 130048
      %v577 = vsel %vm576, %v575, -inf
      %v578 = vrot.slane %v577, 4
      %v579 = vmax.f32 %v577, %v578
      %v580 = vrot.slane %v579, 2
      %v581 = vmax.f32 %v579, %v580
      %v582 = vrot.slane %v581, 1
      %v583 = vmax.f32 %v581, %v582
      %v584 = vsub.f32 %v575, %v583
      %v585 = vmul.f32 %v584, 1.442695
      %v586 = vpow.pop %v585
      %v587 = vsel %vm576, %v586, 0.0
      %v588 = vrot.slane %v587, 4
      %v589 = vadd.f32 %v587, %v588
      %v590 = vrot.slane %v589, 2
      %v591 = vadd.f32 %v589, %v590
      %v592 = vrot.slane %v591, 1
      %v593 = vadd.f32 %v591, %v592
      %v594 = vrcp.pop %v593
      %v595 = vmul.f32 %v586, %v594
      %vm596 = vcmp.ne.f32.partialorder %v407, 0.0
      %v597 = vsel %vm596, 1, 0
      %v598 = vperm.slane %v597, 0
      %vm599 = vcmp.eq.s32.totalorder %v598, 1
      %v600 = vsel %vm599, %v568, -1e+30
      %v601 = vsel %vm576, %v600, -inf
      %602 = vmax.xlane.f32.xlu0 %v601
      %v603 = vpop.xlane.xlu0 %602
      %v604 = vsub.f32 %v600, %v603
      %v605 = vmul.f32 %v604, 1.442695
      %v606 = vpow.pop %v605
      %v607 = vsel %vm576, %v606, 0.0
      %608 = vadd.xlane.f32.xlu0 %v607
      %v609 = vpop.xlane.xlu0 %608
      %v610 = vrcp.pop %v609
      %v611 = vmul.f32 %v606, %v610
      %v612 = vpack.c.bf16 %v595, %v595
      %v613 = vpack.c.bf16 %v611, %v611
      %v615 = vsel %vm576, %v463, 0
      %v618 = vsel %vm576, %v464, 0
      %v621 = vsel %vm576, %v613, 0
      %623 = vmatpush.bf16.xpose.msra.mxu0 0
      %624 = vmatpush.bf16.xpose.msra.mxu0 0
      %625 = vmatpush.bf16.xpose.msra.mxu0 0
      %626 = vmatpush.bf16.xpose.msra.mxu0 0
      %627 = vmatpush.bf16.xpose.msra.mxu0 0
      %628 = vmatpush.bf16.xpose.msra.mxu0 0
      %629 = vmatpush.bf16.xpose.msra.mxu0 0
      %630 = vmatpush.bf16.xpose.msra.mxu0 %v621
      %631 = vmatmul.bf16.gmra.mxu0 %v615
      %v632 = vpop.f32.mrf.mxu0
      %v633 = vadd.f32 0.0, %v632
      %v634 = vpop.f32.mrf.mxu0
      %v635 = vadd.f32 0.0, %v634
      %636 = vmatmul.bf16.gmra.mxu0 %v618
      %v637 = vpop.f32.mrf.mxu0
      %v638 = vadd.f32 0.0, %v637
      %v639 = vpop.f32.mrf.mxu0
      %v640 = vadd.f32 0.0, %v639
      %641 = vdwg.mxu0
      %v642 = vpack.c.bf16 %v633, %v633
      %v643 = vpack.c.bf16 %v635, %v635
      %v644 = vpack.c.bf16 %v638, %v638
      %v645 = vpack.c.bf16 %v640, %v640
      %v650 = vunpack.c.l.b16 %v642
      %v651 = vunpack.c.l.b16 %v643
      %v652 = vunpack.c.l.b16 %v644
      %v653 = vunpack.c.l.b16 %v645
      %v654 = vpack.c.b16 %v651, %v650
      %v655 = vpack.c.b16 %v653, %v652
      %vm656 = vcmask 64512
      %v658 = vsel %vm656, %v492, 0
      %v661 = vsel %vm656, %v493, 0
      %v664 = vsel %vm656, %v654, 0
      %v667 = vsel %vm656, %v655, 0
      %vm669 = vcmask 1043456
      %v671 = vsel %vm669, %v612, 0
      %673 = vmatpush.bf16.msra.mxu0 0
      %674 = vmatpush.bf16.msra.mxu0 0
      %675 = vmatpush.bf16.msra.mxu0 0
      %676 = vmatpush.bf16.msra.mxu0 0
      %677 = vmatpush.bf16.msra.mxu0 0
      %678 = vmatpush.bf16.msra.mxu0 0
      %679 = vmatpush.bf16.msra.mxu0 0
      %680 = vmatpush.bf16.msra.mxu0 %v671
      %681 = vmatmul.bf16.gmra.mxu0 %v658
      %v682 = vpop.f32.mrf.mxu0
      %v683 = vadd.f32 0.0, %v682
      %v684 = vpop.f32.mrf.mxu0
      %v685 = vadd.f32 0.0, %v684
      %686 = vmatmul.bf16.gmra.mxu0 %v661
      %v687 = vpop.f32.mrf.mxu0
      %v688 = vadd.f32 0.0, %v687
      %v689 = vpop.f32.mrf.mxu0
      %v690 = vadd.f32 0.0, %v689
      %691 = vmatmul.bf16.gmra.mxu0 %v664
      %v692 = vpop.f32.mrf.mxu0
      %v693 = vadd.f32 0.0, %v692
      %v694 = vpop.f32.mrf.mxu0
      %v695 = vadd.f32 0.0, %v694
      %696 = vmatmul.bf16.gmra.mxu0 %v667
      %v697 = vpop.f32.mrf.mxu0
      %v698 = vadd.f32 0.0, %v697
      %v699 = vpop.f32.mrf.mxu0
      %v700 = vadd.f32 0.0, %v699
      %701 = vdwg.mxu0
      %v702 = vunpack.c.l.bf16 %v399
      %v703 = vunpack.c.l.bf16 %v400
      %v704 = vunpack.c.l.bf16 %v401
      %v705 = vunpack.c.l.bf16 %v402
      %vm706 = vcmask 125952
      %707 = vst.msk [vmem:[%s379] sm:$0xf] %vm706, %v399
      %708 = vst.msk [vmem:[%s379 + $0x4] sm:$0xf] %vm706, %v400
      %709 = vst.msk [vmem:[%s379 + $0x8] sm:$0xf] %vm706, %v401
      %710 = vst.msk [vmem:[%s379 + $0xc] sm:$0xf] %vm706, %v402
      %v711 = vpack.c.bf16 %v683, %v683
      %v712 = vpack.c.bf16 %v685, %v685
      %v713 = vpack.c.bf16 %v688, %v688
      %v714 = vpack.c.bf16 %v690, %v690
      %715 = vst.msk [vmem:[%s379 + $0x10] sm:$0xf] %vm706, %v711
      %716 = vst.msk [vmem:[%s379 + $0x14] sm:$0xf] %vm706, %v712
      %717 = vst.msk [vmem:[%s379 + $0x18] sm:$0xf] %vm706, %v713
      %718 = vst.msk [vmem:[%s379 + $0x1c] sm:$0xf] %vm706, %v714
      %v719 = vmul.f32 %v702, %v683
      %v720 = vmul.f32 %v703, %v685
      %v721 = vmul.f32 %v704, %v688
      %v722 = vmul.f32 %v705, %v690
      %v723 = vpack.c.bf16 %v719, %v719
      %v724 = vpack.c.bf16 %v720, %v720
      %v725 = vpack.c.bf16 %v721, %v721
      %v726 = vpack.c.bf16 %v722, %v722
      %727 = vst.msk [vmem:[%s379 + $0x20] sm:$0xf] %vm706, %v723
      %728 = vst.msk [vmem:[%s379 + $0x24] sm:$0xf] %vm706, %v724
      %729 = vst.msk [vmem:[%s379 + $0x28] sm:$0xf] %vm706, %v725
      %730 = vst.msk [vmem:[%s379 + $0x2c] sm:$0xf] %vm706, %v726
      %v731 = vmul.f32 %v702, %v693
      %v732 = vmul.f32 %v703, %v695
      %v733 = vmul.f32 %v704, %v698
      %v734 = vmul.f32 %v705, %v700
      %v735 = vpack.c.bf16 %v731, %v731
      %v736 = vpack.c.bf16 %v732, %v732
      %v737 = vpack.c.bf16 %v733, %v733
      %v738 = vpack.c.bf16 %v734, %v734
      %739 = vst.msk [vmem:[%s379 + $0x30] sm:$0xf] %vm706, %v735
      %740 = vst.msk [vmem:[%s379 + $0x34] sm:$0xf] %vm706, %v736
      %741 = vst.msk [vmem:[%s379 + $0x38] sm:$0xf] %vm706, %v737
      %742 = vst.msk [vmem:[%s379 + $0x3c] sm:$0xf] %vm706, %v738
      %s743 = scalar_lea.vmem %s354, 16
      %v744 = vld [vmem:[%s743] sm:$0xf]
      %v745 = vld [vmem:[%s743 + $0x4] sm:$0xf]
      %v746 = vld [vmem:[%s743 + $0x8] sm:$0xf]
      %v747 = vld [vmem:[%s743 + $0xc] sm:$0xf]
      %s748 = scalar_lea.vmem %s361, 16
      %v749 = vld [vmem:[%s748] sm:$0xf]
      %v750 = vld [vmem:[%s748 + $0x4] sm:$0xf]
      %v751 = vld [vmem:[%s748 + $0x8] sm:$0xf]
      %v752 = vld [vmem:[%s748 + $0xc] sm:$0xf]
      %s753 = scalar_lea.vmem %s366, 1
      %v754 = vld [vmem:[%s753] sm:$0x1]
      %s755 = scalar_lea.vmem %s372, 8
      %v756 = vld [vmem:[%s755] sm:$0xff]
      %v757 = vunpack.c.l.bf16 %v749
      %v758 = vunpack.c.l.bf16 %v750
      %v759 = vunpack.c.l.bf16 %v751
      %v760 = vunpack.c.l.bf16 %v752
      %v761 = vmul.f32 %v757, %v416
      %v762 = vmul.f32 %v758, %v421
      %v763 = vmul.f32 %v759, %v426
      %v764 = vmul.f32 %v760, %v431
      %v765 = vpack.c.bf16 %v762, %v761
      %v766 = vpack.c.bf16 %v764, %v763
      %v771 = vunpack.c.l.b16 %v744
      %v772 = vunpack.c.l.b16 %v745
      %v773 = vunpack.c.l.b16 %v746
      %v774 = vunpack.c.l.b16 %v747
      %v775 = vpack.c.b16 %v772, %v771
      %v776 = vpack.c.b16 %v774, %v773
      %779 = vmatpush.bf16.msra.mxu0 0
      %780 = vmatpush.bf16.msra.mxu0 0
      %781 = vmatpush.bf16.msra.mxu0 0
      %782 = vmatpush.bf16.msra.mxu0 0
      %783 = vmatpush.bf16.msra.mxu0 0
      %784 = vmatpush.bf16.msra.mxu0 0
      %785 = vmatpush.bf16.msra.mxu0 %v776
      %786 = vmatpush.bf16.msra.mxu0 %v775
      %787 = vmatmul.bf16.gmra.mxu0 %v469
      %v788 = vpop.f32.mrf.mxu0
      %v789 = vadd.f32 0.0, %v788
      %v790 = vpop.f32.mrf.mxu0
      %791 = vdwg.mxu0
      %v796 = vunpack.c.l.b16 %v749
      %v797 = vunpack.c.l.b16 %v750
      %v798 = vunpack.c.l.b16 %v751
      %v799 = vunpack.c.l.b16 %v752
      %v800 = vpack.c.b16 %v797, %v796
      %v801 = vpack.c.b16 %v799, %v798
      %804 = vxpose.xlu0.c.b16.start [1/8] %v800, 128
      %805 = vxpose.xlu0.c.b16.cont [2/8] %v801, 128
      %806 = vxpose.xlu0.c.b16.cont [3/8] 0, 128
      %807 = vxpose.xlu0.c.b16.cont [4/8] 0, 128
      %808 = vxpose.xlu0.c.b16.cont [5/8] 0, 128
      %809 = vxpose.xlu0.c.b16.cont [6/8] 0, 128
      %810 = vxpose.xlu0.c.b16.cont [7/8] 0, 128
      %811 = vxpose.xlu0.c.b16.end [8/8] 0, 128
      %v812 = vpop.trf.xlu0
      %v813 = vpop.trf.xlu0
      %v814 = vpop.trf.xlu0
      %v815 = vpop.trf.xlu0
      %v816 = vpop.trf.xlu0
      %v817 = vpop.trf.xlu0
      %v818 = vpop.trf.xlu0
      %v819 = vpop.trf.xlu0
      %v821 = vsel %vm467, %v812, 0
      %823 = vmatpush.bf16.msra.mxu0 0
      %824 = vmatpush.bf16.msra.mxu0 0
      %825 = vmatpush.bf16.msra.mxu0 0
      %826 = vmatpush.bf16.msra.mxu0 0
      %827 = vmatpush.bf16.msra.mxu0 0
      %828 = vmatpush.bf16.msra.mxu0 0
      %829 = vmatpush.bf16.msra.mxu0 %v393
      %830 = vmatpush.bf16.msra.mxu0 %v392
      %831 = vmatmul.bf16.gmra.mxu0 %v821
      %v832 = vpop.f32.mrf.mxu0
      %v833 = vadd.f32 0.0, %v832
      %v834 = vpop.f32.mrf.mxu0
      %835 = vdwg.mxu0
      %v836 = vperm.slane %v789, 0
      %837 = vxpose.xlu0.c.b16.start [1/8] %v765, 128
      %838 = vxpose.xlu0.c.b16.cont [2/8] %v766, 128
      %839 = vxpose.xlu0.c.b16.cont [3/8] 0, 128
      %840 = vxpose.xlu0.c.b16.cont [4/8] 0, 128
      %841 = vxpose.xlu0.c.b16.cont [5/8] 0, 128
      %842 = vxpose.xlu0.c.b16.cont [6/8] 0, 128
      %843 = vxpose.xlu0.c.b16.cont [7/8] 0, 128
      %844 = vxpose.xlu0.c.b16.end [8/8] 0, 128
      %v845 = vpop.trf.xlu0
      %v846 = vpop.trf.xlu0
      %v847 = vpop.trf.xlu0
      %v848 = vpop.trf.xlu0
      %v849 = vpop.trf.xlu0
      %v850 = vpop.trf.xlu0
      %v851 = vpop.trf.xlu0
      %v852 = vpop.trf.xlu0
      %v854 = vsel %vm467, %v845, 0
      %856 = vmatpush.bf16.msra.mxu0 0
      %857 = vmatpush.bf16.msra.mxu0 0
      %858 = vmatpush.bf16.msra.mxu0 0
      %859 = vmatpush.bf16.msra.mxu0 0
      %860 = vmatpush.bf16.msra.mxu0 0
      %861 = vmatpush.bf16.msra.mxu0 0
      %862 = vmatpush.bf16.msra.mxu0 %v776
      %863 = vmatpush.bf16.msra.mxu0 %v775
      %864 = vmatmul.bf16.gmra.mxu0 %v854
      %v865 = vpop.f32.mrf.mxu0
      %v866 = vadd.f32 %v836, %v865
      %v867 = vpop.f32.mrf.mxu0
      %868 = vdwg.mxu0
      %870 = vset.pattern.permute.xlu0 0
      %871 = vperm.xlu0 %870, %v833
      %v872 = vpop.permute.xlu0 %871
      %v874 = vadd.f32 %v866, %v872
      %v875 = vadd.f32 %v874, %v567
      %vm876 = vcmp.ne.f32.partialorder %v756, 0.0
      %v877 = vsel %vm876, 1, 0
      %878 = vset.pattern.permute.xlu0 0
      %879 = vperm.xlu0 %878, %v877
      %v880 = vpop.permute.xlu0 %879
      %vm881 = vcmp.eq.s32.totalorder %v880, 1
      %v882 = vsel %vm881, %v875, -1e+30
      %v883 = vsel %vm576, %v882, -inf
      %v884 = vrot.slane %v883, 4
      %v885 = vmax.f32 %v883, %v884
      %v886 = vrot.slane %v885, 2
      %v887 = vmax.f32 %v885, %v886
      %v888 = vrot.slane %v887, 1
      %v889 = vmax.f32 %v887, %v888
      %v890 = vsub.f32 %v882, %v889
      %v891 = vmul.f32 %v890, 1.442695
      %v892 = vpow.pop %v891
      %v893 = vsel %vm576, %v892, 0.0
      %v894 = vrot.slane %v893, 4
      %v895 = vadd.f32 %v893, %v894
      %v896 = vrot.slane %v895, 2
      %v897 = vadd.f32 %v895, %v896
      %v898 = vrot.slane %v897, 1
      %v899 = vadd.f32 %v897, %v898
      %v900 = vrcp.pop %v899
      %v901 = vmul.f32 %v892, %v900
      %vm902 = vcmp.ne.f32.partialorder %v754, 0.0
      %v903 = vsel %vm902, 1, 0
      %v904 = vperm.slane %v903, 0
      %vm905 = vcmp.eq.s32.totalorder %v904, 1
      %v906 = vsel %vm905, %v875, -1e+30
      %v907 = vsel %vm576, %v906, -inf
      %908 = vmax.xlane.f32.xlu0 %v907
      %v909 = vpop.xlane.xlu0 %908
      %v910 = vsub.f32 %v906, %v909
      %v911 = vmul.f32 %v910, 1.442695
      %v912 = vpow.pop %v911
      %v913 = vsel %vm576, %v912, 0.0
      %914 = vadd.xlane.f32.xlu0 %v913
      %v915 = vpop.xlane.xlu0 %914
      %v916 = vrcp.pop %v915
      %v917 = vmul.f32 %v912, %v916
      %v918 = vpack.c.bf16 %v901, %v901
      %v919 = vpack.c.bf16 %v917, %v917
      %v921 = vsel %vm576, %v775, 0
      %v924 = vsel %vm576, %v776, 0
      %v927 = vsel %vm576, %v919, 0
      %929 = vmatpush.bf16.xpose.msra.mxu0 0
      %930 = vmatpush.bf16.xpose.msra.mxu0 0
      %931 = vmatpush.bf16.xpose.msra.mxu0 0
      %932 = vmatpush.bf16.xpose.msra.mxu0 0
      %933 = vmatpush.bf16.xpose.msra.mxu0 0
      %934 = vmatpush.bf16.xpose.msra.mxu0 0
      %935 = vmatpush.bf16.xpose.msra.mxu0 0
      %936 = vmatpush.bf16.xpose.msra.mxu0 %v927
      %937 = vmatmul.bf16.gmra.mxu0 %v921
      %v938 = vpop.f32.mrf.mxu0
      %v939 = vadd.f32 0.0, %v938
      %v940 = vpop.f32.mrf.mxu0
      %v941 = vadd.f32 0.0, %v940
      %942 = vmatmul.bf16.gmra.mxu0 %v924
      %v943 = vpop.f32.mrf.mxu0
      %v944 = vadd.f32 0.0, %v943
      %v945 = vpop.f32.mrf.mxu0
      %v946 = vadd.f32 0.0, %v945
      %947 = vdwg.mxu0
      %v948 = vpack.c.bf16 %v939, %v939
      %v949 = vpack.c.bf16 %v941, %v941
      %v950 = vpack.c.bf16 %v944, %v944
      %v951 = vpack.c.bf16 %v946, %v946
      %v956 = vunpack.c.l.b16 %v948
      %v957 = vunpack.c.l.b16 %v949
      %v958 = vunpack.c.l.b16 %v950
      %v959 = vunpack.c.l.b16 %v951
      %v960 = vpack.c.b16 %v957, %v956
      %v961 = vpack.c.b16 %v959, %v958
      %v963 = vsel %vm656, %v800, 0
      %v966 = vsel %vm656, %v801, 0
      %v969 = vsel %vm656, %v960, 0
      %v972 = vsel %vm656, %v961, 0
      %v975 = vsel %vm669, %v918, 0
      %977 = vmatpush.bf16.msra.mxu0 0
      %978 = vmatpush.bf16.msra.mxu0 0
      %979 = vmatpush.bf16.msra.mxu0 0
      %980 = vmatpush.bf16.msra.mxu0 0
      %981 = vmatpush.bf16.msra.mxu0 0
      %982 = vmatpush.bf16.msra.mxu0 0
      %983 = vmatpush.bf16.msra.mxu0 0
      %984 = vmatpush.bf16.msra.mxu0 %v975
      %985 = vmatmul.bf16.gmra.mxu0 %v963
      %v986 = vpop.f32.mrf.mxu0
      %v987 = vadd.f32 0.0, %v986
      %v988 = vpop.f32.mrf.mxu0
      %v989 = vadd.f32 0.0, %v988
      %990 = vmatmul.bf16.gmra.mxu0 %v966
      %v991 = vpop.f32.mrf.mxu0
      %v992 = vadd.f32 0.0, %v991
      %v993 = vpop.f32.mrf.mxu0
      %v994 = vadd.f32 0.0, %v993
      %995 = vmatmul.bf16.gmra.mxu0 %v969
      %v996 = vpop.f32.mrf.mxu0
      %v997 = vadd.f32 0.0, %v996
      %v998 = vpop.f32.mrf.mxu0
      %v999 = vadd.f32 0.0, %v998
      %1000 = vmatmul.bf16.gmra.mxu0 %v972
      %v1001 = vpop.f32.mrf.mxu0
      %v1002 = vadd.f32 0.0, %v1001
      %v1003 = vpop.f32.mrf.mxu0
      %v1004 = vadd.f32 0.0, %v1003
      %1005 = vdwg.mxu0
      %v1006 = vunpack.c.l.bf16 %v744
      %v1007 = vunpack.c.l.bf16 %v745
      %v1008 = vunpack.c.l.bf16 %v746
      %v1009 = vunpack.c.l.bf16 %v747
      %s1010 = scalar_lea.vmem %s379, 64
      %1011 = vst.msk [vmem:[%s1010] sm:$0xf] %vm706, %v744
      %1012 = vst.msk [vmem:[%s1010 + $0x4] sm:$0xf] %vm706, %v745
      %1013 = vst.msk [vmem:[%s1010 + $0x8] sm:$0xf] %vm706, %v746
      %1014 = vst.msk [vmem:[%s1010 + $0xc] sm:$0xf] %vm706, %v747
      %v1015 = vpack.c.bf16 %v987, %v987
      %v1016 = vpack.c.bf16 %v989, %v989
      %v1017 = vpack.c.bf16 %v992, %v992
      %v1018 = vpack.c.bf16 %v994, %v994
      %1019 = vst.msk [vmem:[%s1010 + $0x10] sm:$0xf] %vm706, %v1015
      %1020 = vst.msk [vmem:[%s1010 + $0x14] sm:$0xf] %vm706, %v1016
      %1021 = vst.msk [vmem:[%s1010 + $0x18] sm:$0xf] %vm706, %v1017
      %1022 = vst.msk [vmem:[%s1010 + $0x1c] sm:$0xf] %vm706, %v1018
      %v1023 = vmul.f32 %v1006, %v987
      %v1024 = vmul.f32 %v1007, %v989
      %v1025 = vmul.f32 %v1008, %v992
      %v1026 = vmul.f32 %v1009, %v994
      %v1027 = vpack.c.bf16 %v1023, %v1023
      %v1028 = vpack.c.bf16 %v1024, %v1024
      %v1029 = vpack.c.bf16 %v1025, %v1025
      %v1030 = vpack.c.bf16 %v1026, %v1026
      %1031 = vst.msk [vmem:[%s1010 + $0x20] sm:$0xf] %vm706, %v1027
      %1032 = vst.msk [vmem:[%s1010 + $0x24] sm:$0xf] %vm706, %v1028
      %1033 = vst.msk [vmem:[%s1010 + $0x28] sm:$0xf] %vm706, %v1029
      %1034 = vst.msk [vmem:[%s1010 + $0x2c] sm:$0xf] %vm706, %v1030
      %v1035 = vmul.f32 %v1006, %v997
      %v1036 = vmul.f32 %v1007, %v999
      %v1037 = vmul.f32 %v1008, %v1002
      %v1038 = vmul.f32 %v1009, %v1004
      %v1039 = vpack.c.bf16 %v1035, %v1035
      %v1040 = vpack.c.bf16 %v1036, %v1036
      %v1041 = vpack.c.bf16 %v1037, %v1037
      %v1042 = vpack.c.bf16 %v1038, %v1038
      %1043 = vst.msk [vmem:[%s1010 + $0x30] sm:$0xf] %vm706, %v1039
      %1044 = vst.msk [vmem:[%s1010 + $0x34] sm:$0xf] %vm706, %v1040
      %1045 = vst.msk [vmem:[%s1010 + $0x38] sm:$0xf] %vm706, %v1041
      %1046 = vst.msk [vmem:[%s1010 + $0x3c] sm:$0xf] %vm706, %v1042
      %s1047 = smul.u32 2, %s20
      %p1048 = scmp.lt.s32.totalorder %s1047, 3
      %s1049 = scalar_select %p1048, %s1047, 3
      %s1050 = smul.addr %s1049, 16
      %s1051 = smul.addr %s1050, 4
      %s1052 = scalar_lea.vmem %s8, %s1051
      // Predicated region
      $region53: #{tpu_custom_call.1} parent=51 // pred_check
        %p1053 = pneg %p226
      $region54: #{tpu_custom_call.1} parent=51 // pred_check_branch
        %1055 = sbr.rel (%p1053) target = $region56
      $region55: #{tpu_custom_call.1} parent=51 // pred_region
        %s1056 = smul.u32 2, %s20
      $region56: #{tpu_custom_call.1} parent=51 // pred_fallthru
        _
    $region52: #{tpu_custom_call.1} parent=5 // pred_fallthru
      _
    %p1057 = scmp.le.s32.totalorder 2, %s15
    // Predicated region
    $region57: #{tpu_custom_call.1} parent=5 // pred_check
      %p1058 = pneg %p1057
    $region58: #{tpu_custom_call.1} parent=5 // pred_check_branch
      %1060 = sbr.rel (%p1058) target = $region60
    $region59: #{tpu_custom_call.1} parent=5 // pred_region
      %s1061 = ssub.s32 %s15, 2
      // Predicated region
      $region61: #{tpu_custom_call.1} parent=59 // pred_check
        %p1062 = pneg %p232
      $region62: #{tpu_custom_call.1} parent=59 // pred_check_branch
        %1064 = sbr.rel (%p1062) target = $region64
      $region63: #{tpu_custom_call.1} parent=59 // pred_region
        %s1065 = smul.u32 2, %s21
        %p1066 = scmp.lt.s32.totalorder %s1065, 3
        %s1067 = scalar_select %p1066, %s1065, 3
        %s1068 = smul.addr %s1067, 16
        %s1069 = smul.addr %s1068, 4
        %s1070 = scalar_lea.vmem %s8, %s1069
      $region64: #{tpu_custom_call.1} parent=59 // pred_fallthru
        _
    $region60: #{tpu_custom_call.1} parent=5 // pred_fallthru
      _
  $region6: #{tpu_custom_call.1} parent=0 // loop_footer
    %s19 = sadd.s32 1, %s15
  $region7: #{tpu_custom_call.1} parent=0 // loop_footer_branch
    %14 = sbr.rel target = $region3
  $region8: #{tpu_custom_call.1} parent=0 // loop_exit
    _

</llo_original>
